<compile_context>
chip_gen: v5e
topology: v5e:2x2
jax: 0.10.0
libtpu: 0.0.40
codegen_flags: <defaults>
</compile_context>

<pallas_src>
import functools

import jax
import jax.numpy as jnp
from jax.experimental import pallas as pl
from jax.experimental.pallas import tpu as pltpu

EPS = 1e-5                       # torch.nn.LayerNorm default eps
_MASK = -1e30                    # additive mask for padded attention keys
_VMEM_LIMIT = 48 * 1024 * 1024   # safe on v5e/v6e (128 MiB) and v7x (64 MiB)


def _round_up(x, m):
    return (x + m - 1) // m * m


# ----------------------------------------------------------------------------
# In-kernel helpers
# ----------------------------------------------------------------------------
def _layernorm(x, w, b):
    mu = jnp.mean(x, axis=-1, keepdims=True)
    var = jnp.mean((x - mu) ** 2, axis=-1, keepdims=True)
    return (x - mu) * jax.lax.rsqrt(var + EPS) * w + b


# ----------------------------------------------------------------------------
# Kernel: row-tiled LayerNorm over the last dim (ln_pre / ln_post)
# ----------------------------------------------------------------------------
def ln_kernel(x_ref, w_ref, b_ref, o_ref):
    o_ref[...] = _layernorm(x_ref[...], w_ref[...], b_ref[...])


def layernorm(x2d, w, b, *, tr=512):
    R, D = x2d.shape
    tr = R if R <= tr else tr                       # full dim or 8-aligned tile
    grid = (pl.cdiv(R, tr),)
    return pl.pallas_call(
        ln_kernel,
        out_shape=jax.ShapeDtypeStruct((R, D), jnp.float32),
        grid=grid,
        in_specs=[pl.BlockSpec((tr, D), lambda i: (i, 0)),
                  pl.BlockSpec((1, D), lambda i: (0, 0)),
                  pl.BlockSpec((1, D), lambda i: (0, 0))],
        out_specs=pl.BlockSpec((tr, D), lambda i: (i, 0)),
        compiler_params=pltpu.CompilerParams(
            dimension_semantics=("parallel",),
            vmem_limit_bytes=_VMEM_LIMIT),
    )(x2d, w.reshape(1, -1), b.reshape(1, -1))


# ----------------------------------------------------------------------------
# Kernel: row-tiled matmul (+ optional bias), bf16 inputs, fp32 accumulation
# (patch-embed conv-as-matmul and the classification head)
# ----------------------------------------------------------------------------
def _mm_kernel(x_ref, w_ref, o_ref):
    o_ref[...] = jnp.dot(x_ref[...], w_ref[...],
                         preferred_element_type=jnp.float32)


def _mm_bias_kernel(x_ref, w_ref, b_ref, o_ref):
    o_ref[...] = (jnp.dot(x_ref[...], w_ref[...],
                          preferred_element_type=jnp.float32) + b_ref[...])


def matmul(x, w, b=None, *, tm=512):
    M, K = x.shape
    N = w.shape[1]
    tm = M if M <= tm else tm
    grid = (pl.cdiv(M, tm),)
    x_spec = pl.BlockSpec((tm, K), lambda i: (i, 0))
    w_spec = pl.BlockSpec((K, N), lambda i: (0, 0))
    o_spec = pl.BlockSpec((tm, N), lambda i: (i, 0))
    cp = pltpu.CompilerParams(dimension_semantics=("parallel",),
                              vmem_limit_bytes=_VMEM_LIMIT)
    out_shape = jax.ShapeDtypeStruct((M, N), jnp.float32)
    if b is None:
        return pl.pallas_call(_mm_kernel, out_shape=out_shape, grid=grid,
                              in_specs=[x_spec, w_spec], out_specs=o_spec,
                              compiler_params=cp)(x, w)
    b_spec = pl.BlockSpec((1, N), lambda i: (0, 0))
    return pl.pallas_call(_mm_bias_kernel, out_shape=out_shape, grid=grid,
                          in_specs=[x_spec, w_spec, b_spec], out_specs=o_spec,
                          compiler_params=cp)(x, w, b.reshape(1, -1))


# ----------------------------------------------------------------------------
# Kernel: one ResidualAttentionBlock over a group of Bseq sequences
#   block rows = Bseq * Npad (Npad = N rounded up to 8); padded key columns
#   are masked out of the softmax, so valid rows match the unpadded math.
# ----------------------------------------------------------------------------
def block_kernel(x_ref,
                 ln1w_ref, ln1b_ref, wqkv_ref, bqkv_ref, wo_ref, bo_ref,
                 ln2w_ref, ln2b_ref, wfc_ref, bfc_ref, wpr_ref, bpr_ref,
                 o_ref, *, bseq, n_pad, n_valid, n_head):
    x = x_ref[...]                                   # (S, D) fp32, S = bseq*n_pad
    S, d_model = x.shape
    dh = d_model // n_head
    bf16 = jnp.bfloat16

    # --- x = x + attn(ln_1(x)) ---
    xn = _layernorm(x, ln1w_ref[...], ln1b_ref[...])
    qkv = (jnp.dot(xn.astype(bf16), wqkv_ref[...],
                   preferred_element_type=jnp.float32)
           + bqkv_ref[...])                          # (S, 3D); q pre-scaled
    q = qkv[:, 0:d_model]
    k = qkv[:, d_model:2 * d_model]
    v = qkv[:, 2 * d_model:3 * d_model]

    def split_heads(t):                              # (S, D) -> (bseq*H, Npad, dh)
        t = t.reshape(bseq, n_pad, n_head, dh)
        t = jnp.transpose(t, (0, 2, 1, 3))
        return t.reshape(bseq * n_head, n_pad, dh)

    qh = split_heads(q).astype(bf16)
    kh = split_heads(k).astype(bf16)
    vh = split_heads(v).astype(bf16)

    s = jnp.einsum('xqd,xkd->xqk', qh, kh,
                   preferred_element_type=jnp.float32)       # (bseq*H, Npad, Npad)
    if n_valid < n_pad:                                       # mask padded keys
        kidx = jax.lax.broadcasted_iota(jnp.int32, s.shape, 2)
        s = jnp.where(kidx < n_valid, s, _MASK)
    s = s - jnp.max(s, axis=-1, keepdims=True)
    p = jnp.exp(s)
    p = p * pl.reciprocal(jnp.sum(p, axis=-1, keepdims=True), approx=True)

    ctx = jnp.einsum('xqk,xkd->xqd', p.astype(bf16), vh,
                     preferred_element_type=jnp.float32)      # (bseq*H, Npad, dh)
    ctx = ctx.reshape(bseq, n_head, n_pad, dh)
    ctx = jnp.transpose(ctx, (0, 2, 1, 3)).reshape(S, d_model)

    attn_out = (jnp.dot(ctx.astype(bf16), wo_ref[...],
                        preferred_element_type=jnp.float32) + bo_ref[...])
    x = x + attn_out

    # --- x = x + mlp(ln_2(x)) ---
    xn2 = _layernorm(x, ln2w_ref[...], ln2b_ref[...])
    h1 = (jnp.dot(xn2.astype(bf16), wfc_ref[...],
                  preferred_element_type=jnp.float32) + bfc_ref[...])
    h1 = h1 * jax.nn.sigmoid(1.702 * h1)             # QuickGELU in fp32
    h2 = (jnp.dot(h1.astype(bf16), wpr_ref[...],
                  preferred_element_type=jnp.float32) + bpr_ref[...])
    o_ref[...] = x + h2


def residual_block(x2d, blk, *, bseq, n_pad, n_valid, n_head):
    R, D = x2d.shape                                 # R = BT * n_pad
    rows = bseq * n_pad
    grid = (R // rows,)
    args = [blk[k] for k in ('ln1_w', 'ln1_b', 'w_qkv', 'b_qkv', 'w_o', 'b_o',
                             'ln2_w', 'ln2_b', 'w_fc', 'b_fc', 'w_pr', 'b_pr')]
    # invariant weights: constant index_map (same block every grid step)
    param_specs = [pl.BlockSpec(a.shape, lambda i: (0, 0)) for a in args]
    return pl.pallas_call(
        functools.partial(block_kernel, bseq=bseq, n_pad=n_pad,
                          n_valid=n_valid, n_head=n_head),
        out_shape=jax.ShapeDtypeStruct((R, D), jnp.float32),
        grid=grid,
        in_specs=[pl.BlockSpec((rows, D), lambda i: (i, 0))] + param_specs,
        out_specs=pl.BlockSpec((rows, D), lambda i: (i, 0)),
        compiler_params=pltpu.CompilerParams(
            dimension_semantics=("parallel",),
            vmem_limit_bytes=_VMEM_LIMIT),
    )(x2d, *args)


# ----------------------------------------------------------------------------
# Parameter prep: bf16 weights, folded q-scale, 2D biases, lane-padded head
# ----------------------------------------------------------------------------
def _prepare(params, n_head):
    f32, bf16 = jnp.float32, jnp.bfloat16
    D = params['positional_embedding'].shape[-1]
    dh = D // n_head
    scale = dh ** -0.5
    col_scale = jnp.concatenate([jnp.full((D,), scale, f32),
                                 jnp.ones((2 * D,), f32)])
    blocks = []
    for blk in params['blocks']:
        blocks.append({
            'ln1_w': blk['ln1_w'].reshape(1, D).astype(f32),
            'ln1_b': blk['ln1_b'].reshape(1, D).astype(f32),
            'w_qkv': (blk['w_qkv'].astype(f32) * col_scale[None, :]).astype(bf16),
            'b_qkv': (blk['b_qkv'].reshape(1, -1).astype(f32) * col_scale[None, :]),
            'w_o': blk['w_o'].astype(bf16),
            'b_o': blk['b_o'].reshape(1, D).astype(f32),
            'ln2_w': blk['ln2_w'].reshape(1, D).astype(f32),
            'ln2_b': blk['ln2_b'].reshape(1, D).astype(f32),
            'w_fc': blk['w_fc'].astype(bf16),
            'b_fc': blk['b_fc'].reshape(1, -1).astype(f32),
            'w_pr': blk['w_pr'].astype(bf16),
            'b_pr': blk['b_pr'].reshape(1, D).astype(f32),
        })
    num_classes = params['head_w'].shape[1]
    nc_pad = _round_up(num_classes, 128)              # lane-dense head output
    head_w = jnp.pad(params['head_w'], ((0, 0), (0, nc_pad - num_classes)))
    head_b = jnp.pad(params['head_b'], (0, nc_pad - num_classes))
    return {
        'conv1_w': params['conv1_w'].astype(bf16),
        'head_w': head_w.astype(bf16),
        'head_b': head_b.astype(f32),
        'num_classes': num_classes,
        'blocks': blocks,
    }


def _pick_bseq(BT, n_pad, max_rows=512):
    """Largest divisor of BT s.t. rows<=max_rows and the grid keeps >=2 steps."""
    best = 1
    for cand in range(1, BT + 1):
        if cand * n_pad > max_rows:
            break
        if BT % cand != 0:
            continue
        if (BT // cand >= 2) or (BT == 1):
            best = cand
    return best


# ----------------------------------------------------------------------------
# Full forward (mirrors CLIP.forward / forward_features, TA=False path)
# ----------------------------------------------------------------------------
def clip_forward(x, params, *, patch_size, n_head):
    B, C, T, H, W = x.shape
    p = patch_size
    hp, wp = H // p, W // p
    NP = hp * wp
    D = params['positional_embedding'].shape[-1]
    N = NP + 1
    N_pad = _round_up(N, 8)
    BT = B * T

    prep = _prepare(params, n_head)

    # 'b c t h w -> (b t) c h w'; patchify-conv == matmul over extracted patches
    xt = jnp.transpose(x, (0, 2, 1, 3, 4)).reshape(BT, C, H, W)
    patches = xt.reshape(BT, C, hp, p, wp, p)
    patches = jnp.transpose(patches, (0, 2, 4, 1, 3, 5)).reshape(BT * NP, C * p * p)
    emb = matmul(patches.astype(jnp.bfloat16), prep['conv1_w'])   # conv1: no bias
    emb = emb.reshape(BT, NP, D)

    # prepend class token, add positional + temporal embeddings
    cls = jnp.broadcast_to(params['class_embedding'].reshape(1, 1, D), (BT, 1, D))
    tok = jnp.concatenate([cls, emb], axis=1) + params['positional_embedding'][None]
    tok = tok.reshape(B, T, N, D) + params['temporal_embedding'][:, :, None, :]
    tok = tok.reshape(BT, N, D)

    # pad tokens along N to a sublane-aligned count (padded keys masked later)
    if N_pad > N:
        tok = jnp.pad(tok, ((0, 0), (0, N_pad - N), (0, 0)))
    tok2d = tok.reshape(BT * N_pad, D)

    # ln_pre
    tok2d = layernorm(tok2d, params['ln_pre_w'], params['ln_pre_b'])

    # transformer (TA=False path for every block)
    bseq = _pick_bseq(BT, N_pad)
    for blk in prep['blocks']:
        tok2d = residual_block(tok2d, blk, bseq=bseq, n_pad=N_pad,
                               n_valid=N, n_head=n_head)

    # ln_post, take class token
    tok2d = layernorm(tok2d, params['ln_post_w'], params['ln_post_b'])
    cls_out = tok2d.reshape(BT, N_pad, D)[:, 0]                    # (BT, D)

    # '(b t) d -> b d t' -> AdaptiveAvgPool3d((1,1,1)) == mean over t
    feat = cls_out.reshape(B, T, D).mean(axis=1)                   # (B, D)
    # TODO(synk): nn.Dropout is identity at inference; omitted.

    # classification head (lane-padded, sliced back to num_classes)
    logits = matmul(feat.astype(jnp.bfloat16), prep['head_w'], prep['head_b'])
    return logits[:, :prep['num_classes']]


# ----------------------------------------------------------------------------
# Deterministic synthetic parameter init (shapes follow CLIP.__init__;
# head in-dim == width here, matching the ln_post feature dim)
# ----------------------------------------------------------------------------
def init_params(key, *, width, layers, patch_size, input_resolution,
                num_frames, num_classes, init_scale=0.001):
    D = width
    NP = (input_resolution // patch_size) ** 2
    scale = D ** -0.5
    keys = iter(jax.random.split(key, 16 + 12 * layers))

    def nx(*s):
        return jax.random.normal(next(keys), s, jnp.float32)

    params = {
        # weights stored in "x @ W" orientation, fp32 master copies
        'conv1_w': 0.02 * nx(3 * patch_size * patch_size, D),
        'class_embedding': scale * nx(D),
        'positional_embedding': scale * nx(NP + 1, D),
        'temporal_embedding': jnp.zeros((1, num_frames, D), jnp.float32),
        'ln_pre_w': 1.0 + 0.05 * nx(D),
        'ln_pre_b': 0.05 * nx(D),
        'ln_post_w': 1.0 + 0.05 * nx(D),
        'ln_post_b': 0.05 * nx(D),
        'head_w': init_scale * 0.02 * nx(D, num_classes),
        'head_b': jnp.zeros((num_classes,), jnp.float32),
        'blocks': [],
    }
    for _ in range(layers):
        params['blocks'].append({
            'ln1_w': 1.0 + 0.05 * nx(D),
            'ln1_b': 0.05 * nx(D),
            'w_qkv': 0.02 * nx(D, 3 * D),
            'b_qkv': 0.02 * nx(3 * D),
            'w_o': 0.02 * nx(D, D),
            'b_o': 0.02 * nx(D),
            'ln2_w': 1.0 + 0.05 * nx(D),
            'ln2_b': 0.05 * nx(D),
            'w_fc': 0.02 * nx(D, 4 * D),
            'b_fc': 0.02 * nx(4 * D),
            'w_pr': 0.02 * nx(4 * D, D),
            'b_pr': 0.02 * nx(D),
        })
    return params


if __name__ == "__main__":
    # small, forward-consistent shapes
    B, C, T, H, W = 2, 3, 2, 16, 16          # video input (b c t h w)
    width, layers, heads, patch = 32, 2, 4, 8
    num_classes = 16                         # head in-dim == width here

    key = jax.random.PRNGKey(0)
    k_in, k_param = jax.random.split(key)
    x = jax.random.normal(k_in, (B, C, T, H, W), jnp.float32)
    params = init_params(k_param, width=width, layers=layers,
                         patch_size=patch, input_resolution=H,
                         num_frames=T, num_classes=num_classes)

    fwd = jax.jit(functools.partial(clip_forward, patch_size=patch, n_head=heads))
    out = fwd(x, params)
    out = jax.block_until_ready(out)
    assert out.shape == (B, num_classes)
    assert jnp.all(jnp.isfinite(out))
    print("KERNEL_OK")
</pallas_src>

<mosaic_0001>
module attributes {stable_mosaic.version = 11 : i64} {
  func.func @_mm_kernel(%arg0: i32, %arg1: memref<16x192xbf16, #tpu.memory_space<vmem>>, %arg2: memref<192x32xbf16, #tpu.memory_space<vmem>>, %arg3: memref<16x32xf32, #tpu.memory_space<vmem>>) attributes {dimension_semantics = [#tpu.dimension_semantics<parallel>], iteration_bounds = array<i64: 1>, scalar_prefetch = 0 : i64, scratch_operands = 0 : i64, tpu.core_type = #tpu.core_type<tc>, window_params = [{transform_indices = @transform_0, window_bounds = array<i64: 16, 192>}, {pipeline_mode = #tpu.pipeline_mode<synchronous>, transform_indices = @transform_1, window_bounds = array<i64: 192, 32>}, {transform_indices = @transform_2, window_bounds = array<i64: 16, 32>}]} {
    %c0 = arith.constant 0 : index
    %c0_0 = arith.constant 0 : index
    %0 = vector.load %arg1[%c0, %c0_0] : memref<16x192xbf16, #tpu.memory_space<vmem>>, vector<16x192xbf16>
    %c0_1 = arith.constant 0 : index
    %c0_2 = arith.constant 0 : index
    %1 = vector.load %arg2[%c0_1, %c0_2] : memref<192x32xbf16, #tpu.memory_space<vmem>>, vector<192x32xbf16>
    %cst = arith.constant dense<0.000000e+00> : vector<16x32xf32>
    %2 = tpu.matmul %0, %1, %cst {dimension_numbers = #tpu.dot_dimension_numbers<[1], [0], [0], [1], [0, 0, 1, 1], [], []>} : vector<16x192xbf16>, vector<192x32xbf16>, vector<16x32xf32> -> vector<16x32xf32>
    %c0_3 = arith.constant 0 : index
    %c0_4 = arith.constant 0 : index
    %3 = vector.load %arg3[%c0_3, %c0_4] : memref<16x32xf32, #tpu.memory_space<vmem>>, vector<16x32xf32>
    tpu.vector_store %arg3[%c0_3, %c0_4], %2 {strides = array<i32>} : memref<16x32xf32, #tpu.memory_space<vmem>>, vector<16x32xf32>,
    return
  }
  func.func @transform_0(%arg0: i32) -> (i32, i32) {
    %c0_i32 = arith.constant 0 : i32
    %c0_i32_0 = arith.constant 0 : i32
    return %arg0, %c0_i32 : i32, i32
  }
  func.func @transform_1(%arg0: i32) -> (i32, i32) {
    %c0_i32 = arith.constant 0 : i32
    %c0_i32_0 = arith.constant 0 : i32
    %c0_i32_1 = arith.constant 0 : i32
    return %c0_i32, %c0_i32_0 : i32, i32
  }
  func.func @transform_2(%arg0: i32) -> (i32, i32) {
    %c0_i32 = arith.constant 0 : i32
    %c0_i32_0 = arith.constant 0 : i32
    return %arg0, %c0_i32 : i32, i32
  }
}

module attributes {stable_mosaic.version = 11 : i64} {
  func.func @ln_kernel(%arg0: i32, %arg1: memref<32x32xf32, #tpu.memory_space<vmem>>, %arg2: memref<1x32xf32, #tpu.memory_space<vmem>>, %arg3: memref<1x32xf32, #tpu.memory_space<vmem>>, %arg4: memref<32x32xf32, #tpu.memory_space<vmem>>) attributes {dimension_semantics = [#tpu.dimension_semantics<parallel>], iteration_bounds = array<i64: 1>, scalar_prefetch = 0 : i64, scratch_operands = 0 : i64, tpu.core_type = #tpu.core_type<tc>, window_params = [{transform_indices = @transform_0, window_bounds = array<i64: 32, 32>}, {pipeline_mode = #tpu.pipeline_mode<synchronous>, transform_indices = @transform_1, window_bounds = array<i64: 1, 32>}, {pipeline_mode = #tpu.pipeline_mode<synchronous>, transform_indices = @transform_2, window_bounds = array<i64: 1, 32>}, {transform_indices = @transform_3, window_bounds = array<i64: 32, 32>}]} {
    %c0 = arith.constant 0 : index
    %c0_0 = arith.constant 0 : index
    %0 = vector.load %arg1[%c0, %c0_0] : memref<32x32xf32, #tpu.memory_space<vmem>>, vector<32x32xf32>
    %c0_1 = arith.constant 0 : index
    %c0_2 = arith.constant 0 : index
    %1 = vector.load %arg2[%c0_1, %c0_2] : memref<1x32xf32, #tpu.memory_space<vmem>>, vector<1x32xf32>
    %c0_3 = arith.constant 0 : index
    %c0_4 = arith.constant 0 : index
    %2 = vector.load %arg3[%c0_3, %c0_4] : memref<1x32xf32, #tpu.memory_space<vmem>>, vector<1x32xf32>
    %cst = arith.constant dense<0.000000e+00> : vector<32xf32>
    %3 = vector.multi_reduction <add>, %0, %cst [1] : vector<32x32xf32> to vector<32xf32>
    %4 = vector.shape_cast %3 : vector<32xf32> to vector<32x1xf32>
    %cst_5 = arith.constant 3.200000e+01 : f32
    %5 = vector.broadcast %cst_5 : f32 to vector<32x1xf32>
    %6 = arith.divf %4, %5 : vector<32x1xf32>
    %7 = vector.broadcast %6 : vector<32x1xf32> to vector<32x32xf32>
    %8 = arith.subf %0, %7 : vector<32x32xf32>
    %9 = arith.mulf %8, %8 : vector<32x32xf32>
    %cst_6 = arith.constant dense<0.000000e+00> : vector<32xf32>
    %10 = vector.multi_reduction <add>, %9, %cst_6 [1] : vector<32x32xf32> to vector<32xf32>
    %11 = vector.shape_cast %10 : vector<32xf32> to vector<32x1xf32>
    %cst_7 = arith.constant 3.200000e+01 : f32
    %12 = vector.broadcast %cst_7 : f32 to vector<32x1xf32>
    %13 = arith.divf %11, %12 : vector<32x1xf32>
    %14 = vector.broadcast %6 : vector<32x1xf32> to vector<32x32xf32>
    %15 = arith.subf %0, %14 : vector<32x32xf32>
    %cst_8 = arith.constant 9.99999974E-6 : f32
    %16 = vector.broadcast %cst_8 : f32 to vector<32x1xf32>
    %17 = arith.addf %13, %16 : vector<32x1xf32>
    %18 = math.rsqrt %17 : vector<32x1xf32>
    %19 = vector.broadcast %18 : vector<32x1xf32> to vector<32x32xf32>
    %20 = arith.mulf %15, %19 : vector<32x32xf32>
    %21 = vector.broadcast %1 : vector<1x32xf32> to vector<32x32xf32>
    %22 = arith.mulf %20, %21 : vector<32x32xf32>
    %23 = vector.broadcast %2 : vector<1x32xf32> to vector<32x32xf32>
    %24 = arith.addf %22, %23 : vector<32x32xf32>
    %c0_9 = arith.constant 0 : index
    %c0_10 = arith.constant 0 : index
    %25 = vector.load %arg4[%c0_9, %c0_10] : memref<32x32xf32, #tpu.memory_space<vmem>>, vector<32x32xf32>
    tpu.vector_store %arg4[%c0_9, %c0_10], %24 {strides = array<i32>} : memref<32x32xf32, #tpu.memory_space<vmem>>, vector<32x32xf32>,
    return
  }
  func.func @transform_0(%arg0: i32) -> (i32, i32) {
    %c0_i32 = arith.constant 0 : i32
    %c0_i32_0 = arith.constant 0 : i32
    return %arg0, %c0_i32 : i32, i32
  }
  func.func @transform_1(%arg0: i32) -> (i32, i32) {
    %c0_i32 = arith.constant 0 : i32
    %c0_i32_0 = arith.constant 0 : i32
    %c0_i32_1 = arith.constant 0 : i32
    return %c0_i32, %c0_i32_0 : i32, i32
  }
  func.func @transform_2(%arg0: i32) -> (i32, i32) {
    %c0_i32 = arith.constant 0 : i32
    %c0_i32_0 = arith.constant 0 : i32
    %c0_i32_1 = arith.constant 0 : i32
    return %c0_i32, %c0_i32_0 : i32, i32
  }
  func.func @transform_3(%arg0: i32) -> (i32, i32) {
    %c0_i32 = arith.constant 0 : i32
    %c0_i32_0 = arith.constant 0 : i32
    return %arg0, %c0_i32 : i32, i32
  }
}

module attributes {stable_mosaic.version = 11 : i64} {
  func.func @block_kernel(%arg0: i32, %arg1: memref<16x32xf32, #tpu.memory_space<vmem>>, %arg2: memref<1x32xf32, #tpu.memory_space<vmem>>, %arg3: memref<1x32xf32, #tpu.memory_space<vmem>>, %arg4: memref<32x96xbf16, #tpu.memory_space<vmem>>, %arg5: memref<1x96xf32, #tpu.memory_space<vmem>>, %arg6: memref<32x32xbf16, #tpu.memory_space<vmem>>, %arg7: memref<1x32xf32, #tpu.memory_space<vmem>>, %arg8: memref<1x32xf32, #tpu.memory_space<vmem>>, %arg9: memref<1x32xf32, #tpu.memory_space<vmem>>, %arg10: memref<32x128xbf16, #tpu.memory_space<vmem>>, %arg11: memref<1x128xf32, #tpu.memory_space<vmem>>, %arg12: memref<128x32xbf16, #tpu.memory_space<vmem>>, %arg13: memref<1x32xf32, #tpu.memory_space<vmem>>, %arg14: memref<16x32xf32, #tpu.memory_space<vmem>>) attributes {dimension_semantics = [#tpu.dimension_semantics<parallel>], iteration_bounds = array<i64: 2>, scalar_prefetch = 0 : i64, scratch_operands = 0 : i64, tpu.core_type = #tpu.core_type<tc>, window_params = [{transform_indices = @transform_0, window_bounds = array<i64: 16, 32>}, {pipeline_mode = #tpu.pipeline_mode<synchronous>, transform_indices = @transform_1, window_bounds = array<i64: 1, 32>}, {pipeline_mode = #tpu.pipeline_mode<synchronous>, transform_indices = @transform_2, window_bounds = array<i64: 1, 32>}, {pipeline_mode = #tpu.pipeline_mode<synchronous>, transform_indices = @transform_3, window_bounds = array<i64: 32, 96>}, {pipeline_mode = #tpu.pipeline_mode<synchronous>, transform_indices = @transform_4, window_bounds = array<i64: 1, 96>}, {pipeline_mode = #tpu.pipeline_mode<synchronous>, transform_indices = @transform_5, window_bounds = array<i64: 32, 32>}, {pipeline_mode = #tpu.pipeline_mode<synchronous>, transform_indices = @transform_6, window_bounds = array<i64: 1, 32>}, {pipeline_mode = #tpu.pipeline_mode<synchronous>, transform_indices = @transform_7, window_bounds = array<i64: 1, 32>}, {pipeline_mode = #tpu.pipeline_mode<synchronous>, transform_indices = @transform_8, window_bounds = array<i64: 1, 32>}, {pipeline_mode = #tpu.pipeline_mode<synchronous>, transform_indices = @transform_9, window_bounds = array<i64: 32, 128>}, {pipeline_mode = #tpu.pipeline_mode<synchronous>, transform_indices = @transform_10, window_bounds = array<i64: 1, 128>}, {pipeline_mode = #tpu.pipeline_mode<synchronous>, transform_indices = @transform_11, window_bounds = array<i64: 128, 32>}, {pipeline_mode = #tpu.pipeline_mode<synchronous>, transform_indices = @transform_12, window_bounds = array<i64: 1, 32>}, {transform_indices = @transform_13, window_bounds = array<i64: 16, 32>}]} {
    %c0 = arith.constant 0 : index
    %c0_0 = arith.constant 0 : index
    %0 = vector.load %arg1[%c0, %c0_0] : memref<16x32xf32, #tpu.memory_space<vmem>>, vector<16x32xf32>
    %c0_1 = arith.constant 0 : index
    %c0_2 = arith.constant 0 : index
    %1 = vector.load %arg2[%c0_1, %c0_2] : memref<1x32xf32, #tpu.memory_space<vmem>>, vector<1x32xf32>
    %c0_3 = arith.constant 0 : index
    %c0_4 = arith.constant 0 : index
    %2 = vector.load %arg3[%c0_3, %c0_4] : memref<1x32xf32, #tpu.memory_space<vmem>>, vector<1x32xf32>
    %cst = arith.constant dense<0.000000e+00> : vector<16xf32>
    %3 = vector.multi_reduction <add>, %0, %cst [1] : vector<16x32xf32> to vector<16xf32>
    %4 = vector.shape_cast %3 : vector<16xf32> to vector<16x1xf32>
    %cst_5 = arith.constant 3.200000e+01 : f32
    %5 = vector.broadcast %cst_5 : f32 to vector<16x1xf32>
    %6 = arith.divf %4, %5 : vector<16x1xf32>
    %7 = vector.broadcast %6 : vector<16x1xf32> to vector<16x32xf32>
    %8 = arith.subf %0, %7 : vector<16x32xf32>
    %9 = arith.mulf %8, %8 : vector<16x32xf32>
    %cst_6 = arith.constant dense<0.000000e+00> : vector<16xf32>
    %10 = vector.multi_reduction <add>, %9, %cst_6 [1] : vector<16x32xf32> to vector<16xf32>
    %11 = vector.shape_cast %10 : vector<16xf32> to vector<16x1xf32>
    %cst_7 = arith.constant 3.200000e+01 : f32
    %12 = vector.broadcast %cst_7 : f32 to vector<16x1xf32>
    %13 = arith.divf %11, %12 : vector<16x1xf32>
    %14 = vector.broadcast %6 : vector<16x1xf32> to vector<16x32xf32>
    %15 = arith.subf %0, %14 : vector<16x32xf32>
    %cst_8 = arith.constant 9.99999974E-6 : f32
    %16 = vector.broadcast %cst_8 : f32 to vector<16x1xf32>
    %17 = arith.addf %13, %16 : vector<16x1xf32>
    %18 = math.rsqrt %17 : vector<16x1xf32>
    %19 = vector.broadcast %18 : vector<16x1xf32> to vector<16x32xf32>
    %20 = arith.mulf %15, %19 : vector<16x32xf32>
    %21 = vector.broadcast %1 : vector<1x32xf32> to vector<16x32xf32>
    %22 = arith.mulf %20, %21 : vector<16x32xf32>
    %23 = vector.broadcast %2 : vector<1x32xf32> to vector<16x32xf32>
    %24 = arith.addf %22, %23 : vector<16x32xf32>
    %25 = arith.truncf %24 : vector<16x32xf32> to vector<16x32xbf16>
    %c0_9 = arith.constant 0 : index
    %c0_10 = arith.constant 0 : index
    %26 = vector.load %arg4[%c0_9, %c0_10] : memref<32x96xbf16, #tpu.memory_space<vmem>>, vector<32x96xbf16>
    %cst_11 = arith.constant dense<0.000000e+00> : vector<16x96xf32>
    %27 = tpu.matmul %25, %26, %cst_11 {dimension_numbers = #tpu.dot_dimension_numbers<[1], [0], [0], [1], [0, 0, 1, 1], [], []>} : vector<16x32xbf16>, vector<32x96xbf16>, vector<16x96xf32> -> vector<16x96xf32>
    %c0_12 = arith.constant 0 : index
    %c0_13 = arith.constant 0 : index
    %28 = vector.load %arg5[%c0_12, %c0_13] : memref<1x96xf32, #tpu.memory_space<vmem>>, vector<1x96xf32>
    %29 = vector.broadcast %28 : vector<1x96xf32> to vector<16x96xf32>
    %30 = arith.addf %27, %29 : vector<16x96xf32>
    %31 = vector.extract_strided_slice %30 {offsets = [0, 0], sizes = [16, 32], strides = [1, 1]} : vector<16x96xf32> to vector<16x32xf32>
    %32 = vector.extract_strided_slice %30 {offsets = [0, 32], sizes = [16, 32], strides = [1, 1]} : vector<16x96xf32> to vector<16x32xf32>
    %33 = vector.extract_strided_slice %30 {offsets = [0, 64], sizes = [16, 32], strides = [1, 1]} : vector<16x96xf32> to vector<16x32xf32>
    %34 = vector.shape_cast %31 : vector<16x32xf32> to vector<2x8x4x8xf32>
    %35 = tpu.transpose %34, [0, 2, 1, 3] : vector<2x8x4x8xf32> -> vector<2x4x8x8xf32>
    %36 = vector.shape_cast %35 : vector<2x4x8x8xf32> to vector<8x8x8xf32>
    %37 = arith.truncf %36 : vector<8x8x8xf32> to vector<8x8x8xbf16>
    %38 = vector.shape_cast %32 : vector<16x32xf32> to vector<2x8x4x8xf32>
    %39 = tpu.transpose %38, [0, 2, 1, 3] : vector<2x8x4x8xf32> -> vector<2x4x8x8xf32>
    %40 = vector.shape_cast %39 : vector<2x4x8x8xf32> to vector<8x8x8xf32>
    %41 = arith.truncf %40 : vector<8x8x8xf32> to vector<8x8x8xbf16>
    %42 = vector.shape_cast %33 : vector<16x32xf32> to vector<2x8x4x8xf32>
    %43 = tpu.transpose %42, [0, 2, 1, 3] : vector<2x8x4x8xf32> -> vector<2x4x8x8xf32>
    %44 = vector.shape_cast %43 : vector<2x4x8x8xf32> to vector<8x8x8xf32>
    %45 = arith.truncf %44 : vector<8x8x8xf32> to vector<8x8x8xbf16>
    "tpu.trace_start"() <{level = 10 : i32, message = "xqd,xkd->xqk"}> : () -> ()
    %cst_14 = arith.constant dense<0.000000e+00> : vector<8x8x8xf32>
    %46 = tpu.matmul %37, %41, %cst_14 {dimension_numbers = #tpu.dot_dimension_numbers<[2], [2], [1], [1], [0, 0, 0, 1, 1, 1], [0], [0]>} : vector<8x8x8xbf16>, vector<8x8x8xbf16>, vector<8x8x8xf32> -> vector<8x8x8xf32>
    "tpu.trace_stop"() : () -> ()
    %47 = tpu.iota {dimensions = array<i32: 2>} : vector<8x8x8xi32>
    %c5_i32 = arith.constant 5 : i32
    %48 = vector.broadcast %c5_i32 : i32 to vector<8x8x8xi32>
    %49 = arith.cmpi slt, %47, %48 : vector<8x8x8xi32>
    %cst_15 = arith.constant -1.000000e+30 : f32
    %50 = vector.broadcast %cst_15 : f32 to vector<8x8x8xf32>
    %51 = arith.select %49, %46, %50 : vector<8x8x8xi1>, vector<8x8x8xf32>
    %cst_16 = arith.constant dense<0xFF800000> : vector<8x8xf32>
    %52 = vector.multi_reduction <maximumf>, %51, %cst_16 [2] : vector<8x8x8xf32> to vector<8x8xf32>
    %53 = vector.shape_cast %52 : vector<8x8xf32> to vector<8x8x1xf32>
    %54 = vector.broadcast %53 : vector<8x8x1xf32> to vector<8x8x8xf32>
    %55 = arith.subf %51, %54 : vector<8x8x8xf32>
    %56 = math.exp %55 : vector<8x8x8xf32>
    %cst_17 = arith.constant dense<0.000000e+00> : vector<8x8xf32>
    %57 = vector.multi_reduction <add>, %56, %cst_17 [2] : vector<8x8x8xf32> to vector<8x8xf32>
    %58 = vector.shape_cast %57 : vector<8x8xf32> to vector<8x8x1xf32>
    %59 = tpu.reciprocal %58 {approx = true} : vector<8x8x1xf32> -> vector<8x8x1xf32>
    %60 = vector.broadcast %59 : vector<8x8x1xf32> to vector<8x8x8xf32>
    %61 = arith.mulf %56, %60 : vector<8x8x8xf32>
    %62 = arith.truncf %61 : vector<8x8x8xf32> to vector<8x8x8xbf16>
    "tpu.trace_start"() <{level = 10 : i32, message = "xqk,xkd->xqd"}> : () -> ()
    %cst_18 = arith.constant dense<0.000000e+00> : vector<8x8x8xf32>
    %63 = tpu.matmul %62, %45, %cst_18 {dimension_numbers = #tpu.dot_dimension_numbers<[2], [1], [1], [2], [0, 0, 0, 1, 1, 2], [0], [0]>} : vector<8x8x8xbf16>, vector<8x8x8xbf16>, vector<8x8x8xf32> -> vector<8x8x8xf32>
    "tpu.trace_stop"() : () -> ()
    %64 = vector.shape_cast %63 : vector<8x8x8xf32> to vector<2x4x8x8xf32>
    %65 = tpu.transpose %64, [0, 2, 1, 3] : vector<2x4x8x8xf32> -> vector<2x8x4x8xf32>
    %66 = vector.shape_cast %65 : vector<2x8x4x8xf32> to vector<16x32xf32>
    %67 = arith.truncf %66 : vector<16x32xf32> to vector<16x32xbf16>
    %c0_19 = arith.constant 0 : index
    %c0_20 = arith.constant 0 : index
    %68 = vector.load %arg6[%c0_19, %c0_20] : memref<32x32xbf16, #tpu.memory_space<vmem>>, vector<32x32xbf16>
    %cst_21 = arith.constant dense<0.000000e+00> : vector<16x32xf32>
    %69 = tpu.matmul %67, %68, %cst_21 {dimension_numbers = #tpu.dot_dimension_numbers<[1], [0], [0], [1], [0, 0, 1, 1], [], []>} : vector<16x32xbf16>, vector<32x32xbf16>, vector<16x32xf32> -> vector<16x32xf32>
    %c0_22 = arith.constant 0 : index
    %c0_23 = arith.constant 0 : index
    %70 = vector.load %arg7[%c0_22, %c0_23] : memref<1x32xf32, #tpu.memory_space<vmem>>, vector<1x32xf32>
    %71 = vector.broadcast %70 : vector<1x32xf32> to vector<16x32xf32>
    %72 = arith.addf %69, %71 : vector<16x32xf32>
    %73 = arith.addf %0, %72 : vector<16x32xf32>
    %c0_24 = arith.constant 0 : index
    %c0_25 = arith.constant 0 : index
    %74 = vector.load %arg8[%c0_24, %c0_25] : memref<1x32xf32, #tpu.memory_space<vmem>>, vector<1x32xf32>
    %c0_26 = arith.constant 0 : index
    %c0_27 = arith.constant 0 : index
    %75 = vector.load %arg9[%c0_26, %c0_27] : memref<1x32xf32, #tpu.memory_space<vmem>>, vector<1x32xf32>
    %cst_28 = arith.constant dense<0.000000e+00> : vector<16xf32>
    %76 = vector.multi_reduction <add>, %73, %cst_28 [1] : vector<16x32xf32> to vector<16xf32>
    %77 = vector.shape_cast %76 : vector<16xf32> to vector<16x1xf32>
    %cst_29 = arith.constant 3.200000e+01 : f32
    %78 = vector.broadcast %cst_29 : f32 to vector<16x1xf32>
    %79 = arith.divf %77, %78 : vector<16x1xf32>
    %80 = vector.broadcast %79 : vector<16x1xf32> to vector<16x32xf32>
    %81 = arith.subf %73, %80 : vector<16x32xf32>
    %82 = arith.mulf %81, %81 : vector<16x32xf32>
    %cst_30 = arith.constant dense<0.000000e+00> : vector<16xf32>
    %83 = vector.multi_reduction <add>, %82, %cst_30 [1] : vector<16x32xf32> to vector<16xf32>
    %84 = vector.shape_cast %83 : vector<16xf32> to vector<16x1xf32>
    %cst_31 = arith.constant 3.200000e+01 : f32
    %85 = vector.broadcast %cst_31 : f32 to vector<16x1xf32>
    %86 = arith.divf %84, %85 : vector<16x1xf32>
    %87 = vector.broadcast %79 : vector<16x1xf32> to vector<16x32xf32>
    %88 = arith.subf %73, %87 : vector<16x32xf32>
    %cst_32 = arith.constant 9.99999974E-6 : f32
    %89 = vector.broadcast %cst_32 : f32 to vector<16x1xf32>
    %90 = arith.addf %86, %89 : vector<16x1xf32>
    %91 = math.rsqrt %90 : vector<16x1xf32>
    %92 = vector.broadcast %91 : vector<16x1xf32> to vector<16x32xf32>
    %93 = arith.mulf %88, %92 : vector<16x32xf32>
    %94 = vector.broadcast %74 : vector<1x32xf32> to vector<16x32xf32>
    %95 = arith.mulf %93, %94 : vector<16x32xf32>
    %96 = vector.broadcast %75 : vector<1x32xf32> to vector<16x32xf32>
    %97 = arith.addf %95, %96 : vector<16x32xf32>
    %98 = arith.truncf %97 : vector<16x32xf32> to vector<16x32xbf16>
    %c0_33 = arith.constant 0 : index
    %c0_34 = arith.constant 0 : index
    %99 = vector.load %arg10[%c0_33, %c0_34] : memref<32x128xbf16, #tpu.memory_space<vmem>>, vector<32x128xbf16>
    %cst_35 = arith.constant dense<0.000000e+00> : vector<16x128xf32>
    %100 = tpu.matmul %98, %99, %cst_35 {dimension_numbers = #tpu.dot_dimension_numbers<[1], [0], [0], [1], [0, 0, 1, 1], [], []>} : vector<16x32xbf16>, vector<32x128xbf16>, vector<16x128xf32> -> vector<16x128xf32>
    %c0_36 = arith.constant 0 : index
    %c0_37 = arith.constant 0 : index
    %101 = vector.load %arg11[%c0_36, %c0_37] : memref<1x128xf32, #tpu.memory_space<vmem>>, vector<1x128xf32>
    %102 = vector.broadcast %101 : vector<1x128xf32> to vector<16x128xf32>
    %103 = arith.addf %100, %102 : vector<16x128xf32>
    %cst_38 = arith.constant 1.702000e+00 : f32
    %104 = vector.broadcast %cst_38 : f32 to vector<16x128xf32>
    %105 = arith.mulf %104, %103 : vector<16x128xf32>
    %106 = arith.negf %105 : vector<16x128xf32>
    %107 = math.exp %106 : vector<16x128xf32>
    %cst_39 = arith.constant 1.000000e+00 : f32
    %108 = vector.broadcast %cst_39 : f32 to vector<16x128xf32>
    %109 = arith.addf %108, %107 : vector<16x128xf32>
    %110 = arith.divf %108, %109 : vector<16x128xf32>
    %111 = arith.mulf %103, %110 : vector<16x128xf32>
    %112 = arith.truncf %111 : vector<16x128xf32> to vector<16x128xbf16>
    %c0_40 = arith.constant 0 : index
    %c0_41 = arith.constant 0 : index
    %113 = vector.load %arg12[%c0_40, %c0_41] : memref<128x32xbf16, #tpu.memory_space<vmem>>, vector<128x32xbf16>
    %cst_42 = arith.constant dense<0.000000e+00> : vector<16x32xf32>
    %114 = tpu.matmul %112, %113, %cst_42 {dimension_numbers = #tpu.dot_dimension_numbers<[1], [0], [0], [1], [0, 0, 1, 1], [], []>} : vector<16x128xbf16>, vector<128x32xbf16>, vector<16x32xf32> -> vector<16x32xf32>
    %c0_43 = arith.constant 0 : index
    %c0_44 = arith.constant 0 : index
    %115 = vector.load %arg13[%c0_43, %c0_44] : memref<1x32xf32, #tpu.memory_space<vmem>>, vector<1x32xf32>
    %116 = vector.broadcast %115 : vector<1x32xf32> to vector<16x32xf32>
    %117 = arith.addf %114, %116 : vector<16x32xf32>
    %118 = arith.addf %73, %117 : vector<16x32xf32>
    %c0_45 = arith.constant 0 : index
    %c0_46 = arith.constant 0 : index
    %119 = vector.load %arg14[%c0_45, %c0_46] : memref<16x32xf32, #tpu.memory_space<vmem>>, vector<16x32xf32>
    tpu.vector_store %arg14[%c0_45, %c0_46], %118 {strides = array<i32>} : memref<16x32xf32, #tpu.memory_space<vmem>>, vector<16x32xf32>,
    return
  }
  func.func @transform_0(%arg0: i32) -> (i32, i32) {
    %c0_i32 = arith.constant 0 : i32
    %c0_i32_0 = arith.constant 0 : i32
    return %arg0, %c0_i32 : i32, i32
  }
  func.func @transform_1(%arg0: i32) -> (i32, i32) {
    %c0_i32 = arith.constant 0 : i32
    %c0_i32_0 = arith.constant 0 : i32
    %c0_i32_1 = arith.constant 0 : i32
    return %c0_i32, %c0_i32_0 : i32, i32
  }
  func.func @transform_2(%arg0: i32) -> (i32, i32) {
    %c0_i32 = arith.constant 0 : i32
    %c0_i32_0 = arith.constant 0 : i32
    %c0_i32_1 = arith.constant 0 : i32
    return %c0_i32, %c0_i32_0 : i32, i32
  }
  func.func @transform_3(%arg0: i32) -> (i32, i32) {
    %c0_i32 = arith.constant 0 : i32
    %c0_i32_0 = arith.constant 0 : i32
    %c0_i32_1 = arith.constant 0 : i32
    return %c0_i32, %c0_i32_0 : i32, i32
  }
  func.func @transform_4(%arg0: i32) -> (i32, i32) {
    %c0_i32 = arith.constant 0 : i32
    %c0_i32_0 = arith.constant 0 : i32
    %c0_i32_1 = arith.constant 0 : i32
    return %c0_i32, %c0_i32_0 : i32, i32
  }
  func.func @transform_5(%arg0: i32) -> (i32, i32) {
    %c0_i32 = arith.constant 0 : i32
    %c0_i32_0 = arith.constant 0 : i32
    %c0_i32_1 = arith.constant 0 : i32
    return %c0_i32, %c0_i32_0 : i32, i32
  }
  func.func @transform_6(%arg0: i32) -> (i32, i32) {
    %c0_i32 = arith.constant 0 : i32
    %c0_i32_0 = arith.constant 0 : i32
    %c0_i32_1 = arith.constant 0 : i32
    return %c0_i32, %c0_i32_0 : i32, i32
  }
  func.func @transform_7(%arg0: i32) -> (i32, i32) {
    %c0_i32 = arith.constant 0 : i32
    %c0_i32_0 = arith.constant 0 : i32
    %c0_i32_1 = arith.constant 0 : i32
    return %c0_i32, %c0_i32_0 : i32, i32
  }
  func.func @transform_8(%arg0: i32) -> (i32, i32) {
    %c0_i32 = arith.constant 0 : i32
    %c0_i32_0 = arith.constant 0 : i32
    %c0_i32_1 = arith.constant 0 : i32
    return %c0_i32, %c0_i32_0 : i32, i32
  }
  func.func @transform_9(%arg0: i32) -> (i32, i32) {
    %c0_i32 = arith.constant 0 : i32
    %c0_i32_0 = arith.constant 0 : i32
    %c0_i32_1 = arith.constant 0 : i32
    return %c0_i32, %c0_i32_0 : i32, i32
  }
  func.func @transform_10(%arg0: i32) -> (i32, i32) {
    %c0_i32 = arith.constant 0 : i32
    %c0_i32_0 = arith.constant 0 : i32
    %c0_i32_1 = arith.constant 0 : i32
    return %c0_i32, %c0_i32_0 : i32, i32
  }
  func.func @transform_11(%arg0: i32) -> (i32, i32) {
    %c0_i32 = arith.constant 0 : i32
    %c0_i32_0 = arith.constant 0 : i32
    %c0_i32_1 = arith.constant 0 : i32
    return %c0_i32, %c0_i32_0 : i32, i32
  }
  func.func @transform_12(%arg0: i32) -> (i32, i32) {
    %c0_i32 = arith.constant 0 : i32
    %c0_i32_0 = arith.constant 0 : i32
    %c0_i32_1 = arith.constant 0 : i32
    return %c0_i32, %c0_i32_0 : i32, i32
  }
  func.func @transform_13(%arg0: i32) -> (i32, i32) {
    %c0_i32 = arith.constant 0 : i32
    %c0_i32_0 = arith.constant 0 : i32
    return %arg0, %c0_i32 : i32, i32
  }
}

module attributes {stable_mosaic.version = 11 : i64} {
  func.func @_mm_bias_kernel(%arg0: i32, %arg1: memref<2x32xbf16, #tpu.memory_space<vmem>>, %arg2: memref<32x128xbf16, #tpu.memory_space<vmem>>, %arg3: memref<1x128xf32, #tpu.memory_space<vmem>>, %arg4: memref<2x128xf32, #tpu.memory_space<vmem>>) attributes {dimension_semantics = [#tpu.dimension_semantics<parallel>], iteration_bounds = array<i64: 1>, scalar_prefetch = 0 : i64, scratch_operands = 0 : i64, tpu.core_type = #tpu.core_type<tc>, window_params = [{transform_indices = @transform_0, window_bounds = array<i64: 2, 32>}, {pipeline_mode = #tpu.pipeline_mode<synchronous>, transform_indices = @transform_1, window_bounds = array<i64: 32, 128>}, {pipeline_mode = #tpu.pipeline_mode<synchronous>, transform_indices = @transform_2, window_bounds = array<i64: 1, 128>}, {transform_indices = @transform_3, window_bounds = array<i64: 2, 128>}]} {
    %c0 = arith.constant 0 : index
    %c0_0 = arith.constant 0 : index
    %0 = vector.load %arg1[%c0, %c0_0] : memref<2x32xbf16, #tpu.memory_space<vmem>>, vector<2x32xbf16>
    %c0_1 = arith.constant 0 : index
    %c0_2 = arith.constant 0 : index
    %1 = vector.load %arg2[%c0_1, %c0_2] : memref<32x128xbf16, #tpu.memory_space<vmem>>, vector<32x128xbf16>
    %cst = arith.constant dense<0.000000e+00> : vector<2x128xf32>
    %2 = tpu.matmul %0, %1, %cst {dimension_numbers = #tpu.dot_dimension_numbers<[1], [0], [0], [1], [0, 0, 1, 1], [], []>} : vector<2x32xbf16>, vector<32x128xbf16>, vector<2x128xf32> -> vector<2x128xf32>
    %c0_3 = arith.constant 0 : index
    %c0_4 = arith.constant 0 : index
    %3 = vector.load %arg3[%c0_3, %c0_4] : memref<1x128xf32, #tpu.memory_space<vmem>>, vector<1x128xf32>
    %4 = vector.broadcast %3 : vector<1x128xf32> to vector<2x128xf32>
    %5 = arith.addf %2, %4 : vector<2x128xf32>
    %c0_5 = arith.constant 0 : index
    %c0_6 = arith.constant 0 : index
    %6 = vector.load %arg4[%c0_5, %c0_6] : memref<2x128xf32, #tpu.memory_space<vmem>>, vector<2x128xf32>
    tpu.vector_store %arg4[%c0_5, %c0_6], %5 {strides = array<i32>} : memref<2x128xf32, #tpu.memory_space<vmem>>, vector<2x128xf32>,
    return
  }
  func.func @transform_0(%arg0: i32) -> (i32, i32) {
    %c0_i32 = arith.constant 0 : i32
    %c0_i32_0 = arith.constant 0 : i32
    return %arg0, %c0_i32 : i32, i32
  }
  func.func @transform_1(%arg0: i32) -> (i32, i32) {
    %c0_i32 = arith.constant 0 : i32
    %c0_i32_0 = arith.constant 0 : i32
    %c0_i32_1 = arith.constant 0 : i32
    return %c0_i32, %c0_i32_0 : i32, i32
  }
  func.func @transform_2(%arg0: i32) -> (i32, i32) {
    %c0_i32 = arith.constant 0 : i32
    %c0_i32_0 = arith.constant 0 : i32
    %c0_i32_1 = arith.constant 0 : i32
    return %c0_i32, %c0_i32_0 : i32, i32
  }
  func.func @transform_3(%arg0: i32) -> (i32, i32) {
    %c0_i32 = arith.constant 0 : i32
    %c0_i32_0 = arith.constant 0 : i32
    return %arg0, %c0_i32 : i32, i32
  }
}

</mosaic_0001>

<llo_original>
// kernel: clip_forward.7
$region0: #{clip_forward.7}
  #allocation0 [shape = 'u32[]', space=smem, size = 0x4, offset = 0x4, fixed_abs, tag = 'smem constant byte address 0x4 - core index']
  #allocation1 [shape = 'u32[72,128]{1,0:T(1,128)}', space=vmem, size = 0x9000, scoped, tag = 'internal scratch']
  %s0 = inlined_call_operand.vmem [shape: f32[32,32], index: 0, kind: input, shape index: {}]
  %s1 = inlined_call_operand.vmem [shape: f32[1,32], index: 1, kind: input, shape index: {}]
  %s2 = inlined_call_operand.vmem [shape: f32[1,32], index: 2, kind: input, shape index: {}]
  %s3 = inlined_call_operand.vmem [shape: f32[32,32], index: 3, kind: output, shape index: {}]
  %s4 = sld [smem:[#allocation0]]
  $region22: #{clip_forward.7} parent=0
    _
  %s6 = ssub.s32 1, %s4
  %s7 = scalar_select 0, %s6, %s4
  // Predicated region
  $region2: #{clip_forward.7} parent=0 // pred_check
    _
  $region3: #{clip_forward.7} parent=0 // pred_check_branch
    %9 = sbr.rel (0) target = $region5
  $region4: #{clip_forward.7} parent=0 // pred_region
    _
  $region5: #{clip_forward.7} parent=0 // pred_fallthru
    _
  // Predicated region
  $region6: #{clip_forward.7} parent=0 // pred_check
    _
  $region7: #{clip_forward.7} parent=0 // pred_check_branch
    %11 = sbr.rel (0) target = $region9
  $region8: #{clip_forward.7} parent=0 // pred_region
    _
  $region9: #{clip_forward.7} parent=0 // pred_fallthru
    _
  // Predicated region
  $region10: #{clip_forward.7} parent=0 // pred_check
    _
  $region11: #{clip_forward.7} parent=0 // pred_check_branch
    %13 = sbr.rel (0) target = $region13
  $region12: #{clip_forward.7} parent=0 // pred_region
    _
  $region13: #{clip_forward.7} parent=0 // pred_fallthru
    _
  %v14 = vld [vmem:[%s0] sm:$0xff]
  %v15 = vld [vmem:[%s0 + $0x8] sm:$0xff]
  %v16 = vld [vmem:[%s0 + $0x10] sm:$0xff]
  %v17 = vld [vmem:[%s0 + $0x18] sm:$0xff]
  %v18 = vld [vmem:[%s1] sm:$0x1]
  %v19 = vld [vmem:[%s2] sm:$0x1]
  %vm20 = vcmask 261120
  %v21 = vsel %vm20, %v14, 0.0
  %22 = vadd.xlane.f32.xlu0 %v21
  %v23 = vpop.xlane.xlu0 %22
  %v24 = vsel %vm20, %v15, 0.0
  %25 = vadd.xlane.f32.xlu0 %v24
  %v26 = vpop.xlane.xlu0 %25
  %v27 = vsel %vm20, %v16, 0.0
  %28 = vadd.xlane.f32.xlu0 %v27
  %v29 = vpop.xlane.xlu0 %28
  %v30 = vsel %vm20, %v17, 0.0
  %31 = vadd.xlane.f32.xlu0 %v30
  %v32 = vpop.xlane.xlu0 %31
  %v33 = vrcp.pop 32.0
  %v34 = vmul.f32 32.0, %v33
  %v35 = vsub.f32 1.0, %v34
  %v36 = vmul.f32 %v33, %v35
  %v37 = vadd.f32 %v33, %v36
  %vm38 = vweird.f32 %v33
  %v39 = vsel %vm38, %v33, %v37
  %v40 = vmul.f32 %v23, %v39
  %v41 = vmul.f32 %v26, %v39
  %v42 = vmul.f32 %v29, %v39
  %v43 = vmul.f32 %v32, %v39
  %v44 = vsub.f32 %v14, %v40
  %v45 = vsub.f32 %v15, %v41
  %v46 = vsub.f32 %v16, %v42
  %v47 = vsub.f32 %v17, %v43
  %v48 = vmul.f32 %v44, %v44
  %v49 = vmul.f32 %v45, %v45
  %v50 = vmul.f32 %v46, %v46
  %v51 = vmul.f32 %v47, %v47
  %v52 = vsel %vm20, %v48, 0.0
  %53 = vadd.xlane.f32.xlu0 %v52
  %v54 = vpop.xlane.xlu0 %53
  %v55 = vsel %vm20, %v49, 0.0
  %56 = vadd.xlane.f32.xlu0 %v55
  %v57 = vpop.xlane.xlu0 %56
  %v58 = vsel %vm20, %v50, 0.0
  %59 = vadd.xlane.f32.xlu0 %v58
  %v60 = vpop.xlane.xlu0 %59
  %v61 = vsel %vm20, %v51, 0.0
  %62 = vadd.xlane.f32.xlu0 %v61
  %v63 = vpop.xlane.xlu0 %62
  %v64 = vmul.f32 %v54, %v39
  %v65 = vmul.f32 %v57, %v39
  %v66 = vmul.f32 %v60, %v39
  %v67 = vmul.f32 %v63, %v39
  %v68 = vadd.f32 %v64, 1e-05
  %v69 = vadd.f32 %v65, 1e-05
  %v70 = vadd.f32 %v66, 1e-05
  %v71 = vadd.f32 %v67, 1e-05
  %v72 = vrsqrt.pop %v68
  %v73 = vmul.f32 %v72, %v68
  %v74 = vmul.f32 %v73, %v72
  %v75 = vmul.f32 0.5, %v74
  %v76 = vsub.f32 1.5, %v75
  %v77 = vmul.f32 %v72, %v76
  %vm78 = vweird.f32 %v68
  %vm79 = vweird.f32 %v72
  %vm80 = vmor %vm78, %vm79
  %v81 = vsel %vm80, %v72, %v77
  %v82 = vrsqrt.pop %v69
  %v83 = vmul.f32 %v82, %v69
  %v84 = vmul.f32 %v83, %v82
  %v85 = vmul.f32 0.5, %v84
  %v86 = vsub.f32 1.5, %v85
  %v87 = vmul.f32 %v82, %v86
  %vm88 = vweird.f32 %v69
  %vm89 = vweird.f32 %v82
  %vm90 = vmor %vm88, %vm89
  %v91 = vsel %vm90, %v82, %v87
  %v92 = vrsqrt.pop %v70
  %v93 = vmul.f32 %v92, %v70
  %v94 = vmul.f32 %v93, %v92
  %v95 = vmul.f32 0.5, %v94
  %v96 = vsub.f32 1.5, %v95
  %v97 = vmul.f32 %v92, %v96
  %vm98 = vweird.f32 %v70
  %vm99 = vweird.f32 %v92
  %vm100 = vmor %vm98, %vm99
  %v101 = vsel %vm100, %v92, %v97
  %v102 = vrsqrt.pop %v71
  %v103 = vmul.f32 %v102, %v71
  %v104 = vmul.f32 %v103, %v102
  %v105 = vmul.f32 0.5, %v104
  %v106 = vsub.f32 1.5, %v105
  %v107 = vmul.f32 %v102, %v106
  %vm108 = vweird.f32 %v71
  %vm109 = vweird.f32 %v102
  %vm110 = vmor %vm108, %vm109
  %v111 = vsel %vm110, %v102, %v107
  %v112 = vmul.f32 %v44, %v81
  %v113 = vmul.f32 %v45, %v91
  %v114 = vmul.f32 %v46, %v101
  %v115 = vmul.f32 %v47, %v111
  %v117 = vperm.slane %v18, 0
  %v119 = vmul.f32 %v112, %v117
  %v120 = vmul.f32 %v113, %v117
  %v121 = vmul.f32 %v114, %v117
  %v122 = vmul.f32 %v115, %v117
  %v124 = vperm.slane %v19, 0
  %v126 = vadd.f32 %v119, %v124
  %v127 = vadd.f32 %v120, %v124
  %v128 = vadd.f32 %v121, %v124
  %v129 = vadd.f32 %v122, %v124
  %130 = vst.msk [vmem:[%s3] sm:$0xff] %vm20, %v126
  %131 = vst.msk [vmem:[%s3 + $0x8] sm:$0xff] %vm20, %v127
  %132 = vst.msk [vmem:[%s3 + $0x10] sm:$0xff] %vm20, %v128
  %133 = vst.msk [vmem:[%s3 + $0x18] sm:$0xff] %vm20, %v129
  // Predicated region
  $region14: #{clip_forward.7} parent=0 // pred_check
    _
  $region15: #{clip_forward.7} parent=0 // pred_check_branch
    %135 = sbr.rel (0) target = $region17
  $region16: #{clip_forward.7} parent=0 // pred_region
    _
  $region17: #{clip_forward.7} parent=0 // pred_fallthru
    _
  // Predicated region
  $region18: #{clip_forward.7} parent=0 // pred_check
    _
  $region19: #{clip_forward.7} parent=0 // pred_check_branch
    %137 = sbr.rel (0) target = $region21
  $region20: #{clip_forward.7} parent=0 // pred_region
    _
  $region21: #{clip_forward.7} parent=0 // pred_fallthru
    _

// kernel: clip_forward.6
$region0: #{clip_forward.6}
  #allocation0 [shape = 'u32[]', space=smem, size = 0x4, offset = 0x4, fixed_abs, tag = 'smem constant byte address 0x4 - core index']
  #allocation1 [shape = 'u32[72,128]{1,0:T(1,128)}', space=vmem, size = 0x9000, scoped, tag = 'internal scratch']
  %s0 = inlined_call_operand.vmem [shape: bf16[16,192], index: 0, kind: input, shape index: {}]
  %s1 = inlined_call_operand.vmem [shape: bf16[192,32], index: 1, kind: input, shape index: {}]
  %s2 = inlined_call_operand.vmem [shape: f32[16,32], index: 2, kind: output, shape index: {}]
  %s3 = sld [smem:[#allocation0]]
  $region18: #{clip_forward.6} parent=0
    _
  %s5 = ssub.s32 1, %s3
  %s6 = scalar_select 0, %s5, %s3
  // Predicated region
  $region2: #{clip_forward.6} parent=0 // pred_check
    _
  $region3: #{clip_forward.6} parent=0 // pred_check_branch
    %8 = sbr.rel (0) target = $region5
  $region4: #{clip_forward.6} parent=0 // pred_region
    _
  $region5: #{clip_forward.6} parent=0 // pred_fallthru
    _
  // Predicated region
  $region6: #{clip_forward.6} parent=0 // pred_check
    _
  $region7: #{clip_forward.6} parent=0 // pred_check_branch
    %10 = sbr.rel (0) target = $region9
  $region8: #{clip_forward.6} parent=0 // pred_region
    _
  $region9: #{clip_forward.6} parent=0 // pred_fallthru
    _
  %v12 = vld [vmem:[%s0] sm:$0xff]
  %v13 = vld [vmem:[%s0 + $0x8] sm:$0xff]
  %v14 = vld [vmem:[%s1] sm:$0xf]
  %v15 = vld [vmem:[%s1 + $0x4] sm:$0xf]
  %v16 = vld [vmem:[%s1 + $0x8] sm:$0xf]
  %v17 = vld [vmem:[%s1 + $0xc] sm:$0xf]
  %v18 = vld [vmem:[%s1 + $0x10] sm:$0xf]
  %v19 = vld [vmem:[%s1 + $0x14] sm:$0xf]
  %v20 = vld [vmem:[%s1 + $0x18] sm:$0xf]
  %v21 = vld [vmem:[%s1 + $0x1c] sm:$0xf]
  %v22 = vld [vmem:[%s1 + $0x20] sm:$0xf]
  %v23 = vld [vmem:[%s1 + $0x24] sm:$0xf]
  %v24 = vld [vmem:[%s1 + $0x28] sm:$0xf]
  %v25 = vld [vmem:[%s1 + $0x2c] sm:$0xf]
  %v26 = vld [vmem:[%s1 + $0x30] sm:$0xf]
  %v27 = vld [vmem:[%s1 + $0x34] sm:$0xf]
  %v28 = vld [vmem:[%s1 + $0x38] sm:$0xf]
  %v29 = vld [vmem:[%s1 + $0x3c] sm:$0xf]
  %v30 = vld [vmem:[%s1 + $0x40] sm:$0xf]
  %v31 = vld [vmem:[%s1 + $0x44] sm:$0xf]
  %v32 = vld [vmem:[%s1 + $0x48] sm:$0xf]
  %v33 = vld [vmem:[%s1 + $0x4c] sm:$0xf]
  %v34 = vld [vmem:[%s1 + $0x50] sm:$0xf]
  %v35 = vld [vmem:[%s1 + $0x54] sm:$0xf]
  %v36 = vld [vmem:[%s1 + $0x58] sm:$0xf]
  %v37 = vld [vmem:[%s1 + $0x5c] sm:$0xf]
  %v40 = vunpack.c.l.b16 %v12
  %v41 = vunpack.c.h.b16 %v12
  %v42 = vunpack.c.l.b16 %v13
  %v43 = vunpack.c.h.b16 %v13
  %v44 = vpack.c.b16 %v42, %v40
  %v45 = vpack.c.b16 %v43, %v41
  %v71 = vunpack.c.l.b16 %v14
  %v72 = vunpack.c.l.b16 %v15
  %v73 = vunpack.c.l.b16 %v16
  %v74 = vunpack.c.l.b16 %v17
  %v75 = vunpack.c.l.b16 %v18
  %v76 = vunpack.c.l.b16 %v19
  %v77 = vunpack.c.l.b16 %v20
  %v78 = vunpack.c.l.b16 %v21
  %v79 = vunpack.c.l.b16 %v22
  %v80 = vunpack.c.l.b16 %v23
  %v81 = vunpack.c.l.b16 %v24
  %v82 = vunpack.c.l.b16 %v25
  %v83 = vunpack.c.l.b16 %v26
  %v84 = vunpack.c.l.b16 %v27
  %v85 = vunpack.c.l.b16 %v28
  %v86 = vunpack.c.l.b16 %v29
  %v87 = vunpack.c.l.b16 %v30
  %v88 = vunpack.c.l.b16 %v31
  %v89 = vunpack.c.l.b16 %v32
  %v90 = vunpack.c.l.b16 %v33
  %v91 = vunpack.c.l.b16 %v34
  %v92 = vunpack.c.l.b16 %v35
  %v93 = vunpack.c.l.b16 %v36
  %v94 = vunpack.c.l.b16 %v37
  %v95 = vpack.c.b16 %v72, %v71
  %v96 = vpack.c.b16 %v74, %v73
  %v97 = vpack.c.b16 %v76, %v75
  %v98 = vpack.c.b16 %v78, %v77
  %v99 = vpack.c.b16 %v80, %v79
  %v100 = vpack.c.b16 %v82, %v81
  %v101 = vpack.c.b16 %v84, %v83
  %v102 = vpack.c.b16 %v86, %v85
  %v103 = vpack.c.b16 %v88, %v87
  %v104 = vpack.c.b16 %v90, %v89
  %v105 = vpack.c.b16 %v92, %v91
  %v106 = vpack.c.b16 %v94, %v93
  %vm119 = vcmask 523264
  %v121 = vsel %vm119, %v45, 0
  %123 = vmatpush.bf16.msra.mxu0 %v102
  %124 = vmatpush.bf16.msra.mxu0 %v101
  %125 = vmatpush.bf16.msra.mxu0 %v100
  %126 = vmatpush.bf16.msra.mxu0 %v99
  %127 = vmatpush.bf16.msra.mxu0 %v98
  %128 = vmatpush.bf16.msra.mxu0 %v97
  %129 = vmatpush.bf16.msra.mxu0 %v96
  %130 = vmatpush.bf16.msra.mxu0 %v95
  %131 = vmatmul.bf16.gmra.mxu0 %v44
  %v132 = vpop.f32.mrf.mxu0
  %v133 = vadd.f32 0.0, %v132
  %v134 = vpop.f32.mrf.mxu0
  %v135 = vadd.f32 0.0, %v134
  %136 = vdwg.mxu0
  %137 = vmatpush.bf16.msra.mxu0 0
  %138 = vmatpush.bf16.msra.mxu0 0
  %139 = vmatpush.bf16.msra.mxu0 0
  %140 = vmatpush.bf16.msra.mxu0 0
  %141 = vmatpush.bf16.msra.mxu0 %v106
  %142 = vmatpush.bf16.msra.mxu0 %v105
  %143 = vmatpush.bf16.msra.mxu0 %v104
  %144 = vmatpush.bf16.msra.mxu0 %v103
  %145 = vmatmul.bf16.gmra.mxu0 %v121
  %v146 = vpop.f32.mrf.mxu0
  %v147 = vadd.f32 %v133, %v146
  %v148 = vpop.f32.mrf.mxu0
  %v149 = vadd.f32 %v135, %v148
  %150 = vdwg.mxu0
  %vm151 = vcmask 261120
  %152 = vst.msk [vmem:[%s2] sm:$0xff] %vm151, %v147
  %153 = vst.msk [vmem:[%s2 + $0x8] sm:$0xff] %vm151, %v149
  // Predicated region
  $region10: #{clip_forward.6} parent=0 // pred_check
    _
  $region11: #{clip_forward.6} parent=0 // pred_check_branch
    %155 = sbr.rel (0) target = $region13
  $region12: #{clip_forward.6} parent=0 // pred_region
    _
  $region13: #{clip_forward.6} parent=0 // pred_fallthru
    _
  // Predicated region
  $region14: #{clip_forward.6} parent=0 // pred_check
    _
  $region15: #{clip_forward.6} parent=0 // pred_check_branch
    %157 = sbr.rel (0) target = $region17
  $region16: #{clip_forward.6} parent=0 // pred_region
    _
  $region17: #{clip_forward.6} parent=0 // pred_fallthru
    _

// kernel: clip_forward.11
$region0: #{clip_forward.11}
  #allocation0 [shape = 'u32[]', space=smem, size = 0x4, offset = 0x4, fixed_abs, tag = 'smem constant byte address 0x4 - core index']
  #allocation1 [shape = 'u32[72,128]{1,0:T(1,128)}', space=vmem, size = 0x9000, scoped, tag = 'internal scratch']
  %s0 = inlined_call_operand.vmem [shape: bf16[2,32], index: 0, kind: input, shape index: {}]
  %s1 = inlined_call_operand.vmem [shape: bf16[32,128], index: 1, kind: input, shape index: {}]
  %s2 = inlined_call_operand.vmem [shape: f32[1,128], index: 2, kind: input, shape index: {}]
  %s3 = inlined_call_operand.hbm [shape: f32[2,128], index: 3, kind: output, shape index: {}]
  %s4 = sld [smem:[#allocation0]]
  $region22: #{clip_forward.11} parent=0
    _
  %s6 = ssub.s32 1, %s4
  %s7 = scalar_select 0, %s6, %s4
  $region1: #{clip_forward.11} parent=0
    #allocation2 [shape = 'u8[1024]{0}', space=vmem, size = 0x400, scoped, tag = 'output window, operand 0, single buffered']
    #allocation3 [shape = 's32[1]{0}', space=sflag, size = 0x4, scoped, tag = 'scoped memory for clip_forward.11']
    %8 = vsyncpa [#allocation3], 0
    // Predicated region
    $region2: #{clip_forward.11} parent=1 // pred_check
      _
    $region3: #{clip_forward.11} parent=1 // pred_check_branch
      %10 = sbr.rel (0) target = $region5
    $region4: #{clip_forward.11} parent=1 // pred_region
      _
    $region5: #{clip_forward.11} parent=1 // pred_fallthru
      _
    // Predicated region
    $region6: #{clip_forward.11} parent=1 // pred_check
      _
    $region7: #{clip_forward.11} parent=1 // pred_check_branch
      %12 = sbr.rel (0) target = $region9
    $region8: #{clip_forward.11} parent=1 // pred_region
      _
    $region9: #{clip_forward.11} parent=1 // pred_fallthru
      _
    // Predicated region
    $region10: #{clip_forward.11} parent=1 // pred_check
      _
    $region11: #{clip_forward.11} parent=1 // pred_check_branch
      %14 = sbr.rel (0) target = $region13
    $region12: #{clip_forward.11} parent=1 // pred_region
      _
    $region13: #{clip_forward.11} parent=1 // pred_fallthru
      _
    %v16 = vld [vmem:[%s0] sm:$0x1]
    %v17 = vld [vmem:[%s1] sm:$0xf]
    %v18 = vld [vmem:[%s1 + $0x4] sm:$0xf]
    %v19 = vld [vmem:[%s1 + $0x8] sm:$0xf]
    %v20 = vld [vmem:[%s1 + $0xc] sm:$0xf]
    %v21 = vld [vmem:[%s2] sm:$0x1]
    %v23 = vperm.slane %v21, 0
    %v29 = vunpack.c.l.b16 %v17
    %v30 = vunpack.c.l.b16 %v18
    %v31 = vunpack.c.l.b16 %v19
    %v32 = vunpack.c.l.b16 %v20
    %v33 = vpack.c.b16 %v30, %v29
    %v34 = vpack.c.b16 %v32, %v31
    %vm37 = vcmask 261120
    %v39 = vsel %vm37, %v16, 0
    %41 = vmatpush.bf16.msra.mxu0 0
    %42 = vmatpush.bf16.msra.mxu0 0
    %43 = vmatpush.bf16.msra.mxu0 0
    %44 = vmatpush.bf16.msra.mxu0 0
    %45 = vmatpush.bf16.msra.mxu0 0
    %46 = vmatpush.bf16.msra.mxu0 0
    %47 = vmatpush.bf16.msra.mxu0 %v34
    %48 = vmatpush.bf16.msra.mxu0 %v33
    %49 = vmatmul.bf16.gmra.mxu0 %v39
    %v50 = vpop.f32.mrf.mxu0
    %v51 = vadd.f32 %v23, %v50
    %v52 = vpop.f32.mrf.mxu0
    %53 = vdwg.mxu0
    %54 = vst [vmem:[#allocation2] sm:$0x3] %v51
    // Predicated region
    $region14: #{clip_forward.11} parent=1 // pred_check
      _
    $region15: #{clip_forward.11} parent=1 // pred_check_branch
      %56 = sbr.rel (0) target = $region17
    $region16: #{clip_forward.11} parent=1 // pred_region
      %58 = vsyncadd [#allocation3], 0
      %s60 = sshll.u32 [#allocation2], 4
      %s61 = int_to_ptr.vmem [resolvable:$true] %s60
      %s62 = sshll.u32 %s3, 4
      %s63 = int_to_ptr.hbm [resolvable:$true] %s62
      %65 = dma.vmem_to_hbm [thread:$0]  %s61, 32, %s63, [#allocation3]
    $region17: #{clip_forward.11} parent=1 // pred_fallthru
      _
    // Predicated region
    $region18: #{clip_forward.11} parent=1 // pred_check
      _
    $region19: #{clip_forward.11} parent=1 // pred_check_branch
      %67 = sbr.rel (0) target = $region21
    $region20: #{clip_forward.11} parent=1 // pred_region
      %69 = dma.done [#allocation3], 32
    $region21: #{clip_forward.11} parent=1 // pred_fallthru
      _
    %70 = vsyncpa [#allocation3], 1

// kernel: clip_forward.8
$region0: #{clip_forward.8}
  #allocation0 [shape = 'u32[]', space=smem, size = 0x4, offset = 0x4, fixed_abs, tag = 'smem constant byte address 0x4 - core index']
  #allocation1 [shape = 'u32[72,128]{1,0:T(1,128)}', space=vmem, size = 0x9000, scoped, tag = 'internal scratch']
  %s0 = inlined_call_operand.vmem [shape: f32[32,32], index: 0, kind: input, shape index: {}]
  %s1 = inlined_call_operand.vmem [shape: f32[1,32], index: 1, kind: input, shape index: {}]
  %s2 = inlined_call_operand.vmem [shape: f32[1,32], index: 2, kind: input, shape index: {}]
  %s3 = inlined_call_operand.vmem [shape: bf16[32,96], index: 3, kind: input, shape index: {}]
  %s4 = inlined_call_operand.vmem [shape: f32[1,96], index: 4, kind: input, shape index: {}]
  %s5 = inlined_call_operand.vmem [shape: bf16[32,32], index: 5, kind: input, shape index: {}]
  %s6 = inlined_call_operand.vmem [shape: f32[1,32], index: 6, kind: input, shape index: {}]
  %s7 = inlined_call_operand.vmem [shape: f32[1,32], index: 7, kind: input, shape index: {}]
  %s8 = inlined_call_operand.vmem [shape: f32[1,32], index: 8, kind: input, shape index: {}]
  %s9 = inlined_call_operand.vmem [shape: bf16[32,128], index: 9, kind: input, shape index: {}]
  %s10 = inlined_call_operand.vmem [shape: f32[1,128], index: 10, kind: input, shape index: {}]
  %s11 = inlined_call_operand.vmem [shape: bf16[128,32], index: 11, kind: input, shape index: {}]
  %s12 = inlined_call_operand.vmem [shape: f32[1,32], index: 12, kind: input, shape index: {}]
  %s13 = inlined_call_operand.vmem [shape: f32[32,32], index: 13, kind: output, shape index: {}]
  %s14 = sld [smem:[#allocation0]]
  $region85: #{clip_forward.8} parent=0
    _
  %s16 = ssub.s32 1, %s14
  %s17 = scalar_select 0, %s16, %s14
  loop: start=0, step=1, limit=4
  $region2: #{clip_forward.8} parent=0 // loop_pre_header
    _
  $region3: #{clip_forward.8} parent=0 // loop_header
    %s19 = sphi 0, %s23
    %p20 = scmp.ge.s32.totalorder %s19, 4
    %s29 = sphi 0, %s31
    %s32 = sphi 0, %s29
    %s33 = sphi 0, %s32
    %s49 = sphi 0, %s33
    %s53 = sphi 0, %s53
    %s55 = sphi 0, %s53
    %s56 = sphi 0, %s55
    %s70 = sphi 0, %s56
    %s74 = sphi 0, %s74
    %s76 = sphi 0, %s74
    %s77 = sphi 0, %s76
    %s91 = sphi 0, %s77
    %s95 = sphi 0, %s95
    %s97 = sphi 0, %s95
    %s98 = sphi 0, %s97
    %s112 = sphi 0, %s98
    %s116 = sphi 0, %s116
    %s118 = sphi 0, %s116
    %s119 = sphi 0, %s118
    %s133 = sphi 0, %s119
    %s137 = sphi 0, %s137
    %s139 = sphi 0, %s137
    %s140 = sphi 0, %s139
    %s154 = sphi 0, %s140
    %s158 = sphi 0, %s158
    %s160 = sphi 0, %s158
    %s161 = sphi 0, %s160
    %s175 = sphi 0, %s161
    %s179 = sphi 0, %s179
    %s181 = sphi 0, %s179
    %s182 = sphi 0, %s181
    %s196 = sphi 0, %s182
    %s200 = sphi 0, %s200
    %s202 = sphi 0, %s200
    %s203 = sphi 0, %s202
    %s217 = sphi 0, %s203
    %s221 = sphi 0, %s221
    %s223 = sphi 0, %s221
    %s224 = sphi 0, %s223
    %s238 = sphi 0, %s224
    %s242 = sphi 0, %s242
    %s244 = sphi 0, %s242
    %s245 = sphi 0, %s244
    %s259 = sphi 0, %s245
    %s263 = sphi 0, %s263
    %s265 = sphi 0, %s263
    %s266 = sphi 0, %s265
    %s280 = sphi 0, %s266
    %s284 = sphi 0, %s284
    %s286 = sphi 0, %s284
    %s287 = sphi 0, %s286
    %s301 = sphi 0, %s287
    %s307 = sphi 0, %s309
    %s310 = sphi 0, %s307
    %s311 = sphi 0, %s310
    %s327 = sphi 0, %s311
  $region4: #{clip_forward.8} parent=0 // loop_header_branch
    %22 = sbr.rel (%p20) target = $region8
  $region5: #{clip_forward.8} parent=0 // loop_body
    %s24 = ssub.s32 %s19, 1
    %s25 = ssub.s32 %s19, 2
    %s26 = sadd.s32 %s19, 1
    %s27 = ssub.s32 %s19, %s26
    %p28 = scmp.eq.s32.totalorder %s27, 0
    %s30 = sadd.s32 %s29, 1
    %s31 = scalar_select %p28, %s29, %s30
    %p34 = pneg %p28
    %p35 = scmp.eq.s32.totalorder %s19, 1
    %p36 = por %p34, %p35
    %p37 = scmp.ne.s32.totalorder %s29, %s32
    %p38 = scmp.eq.s32.totalorder %s19, 0
    %p39 = por %p37, %p38
    %p40 = scmp.ne.s32.totalorder %s29, %s32
    %p41 = scmp.eq.s32.totalorder %s24, 1
    %p42 = por %p40, %p41
    %p43 = scmp.ne.s32.totalorder %s32, %s33
    %p44 = scmp.eq.s32.totalorder %s24, 0
    %p45 = por %p43, %p44
    %p46 = scmp.ne.s32.totalorder %s32, %s33
    %p47 = scmp.eq.s32.totalorder %s25, 1
    %p48 = por %p46, %p47
    %p50 = scmp.ne.s32.totalorder %s33, %s49
    %p51 = scmp.eq.s32.totalorder %s25, 0
    %p52 = por %p50, %p51
    %s54 = sadd.s32 %s53, 1
    %p57 = scmp.eq.s32.totalorder %s19, 1
    %p58 = scmp.ne.s32.totalorder %s53, %s55
    %p59 = scmp.eq.s32.totalorder %s19, 0
    %p60 = por %p58, %p59
    %p61 = scmp.ne.s32.totalorder %s53, %s55
    %p62 = scmp.eq.s32.totalorder %s24, 1
    %p63 = por %p61, %p62
    %p64 = scmp.ne.s32.totalorder %s55, %s56
    %p65 = scmp.eq.s32.totalorder %s24, 0
    %p66 = por %p64, %p65
    %p67 = scmp.ne.s32.totalorder %s55, %s56
    %p68 = scmp.eq.s32.totalorder %s25, 1
    %p69 = por %p67, %p68
    %p71 = scmp.ne.s32.totalorder %s56, %s70
    %p72 = scmp.eq.s32.totalorder %s25, 0
    %p73 = por %p71, %p72
    %s75 = sadd.s32 %s74, 1
    %p78 = scmp.eq.s32.totalorder %s19, 1
    %p79 = scmp.ne.s32.totalorder %s74, %s76
    %p80 = scmp.eq.s32.totalorder %s19, 0
    %p81 = por %p79, %p80
    %p82 = scmp.ne.s32.totalorder %s74, %s76
    %p83 = scmp.eq.s32.totalorder %s24, 1
    %p84 = por %p82, %p83
    %p85 = scmp.ne.s32.totalorder %s76, %s77
    %p86 = scmp.eq.s32.totalorder %s24, 0
    %p87 = por %p85, %p86
    %p88 = scmp.ne.s32.totalorder %s76, %s77
    %p89 = scmp.eq.s32.totalorder %s25, 1
    %p90 = por %p88, %p89
    %p92 = scmp.ne.s32.totalorder %s77, %s91
    %p93 = scmp.eq.s32.totalorder %s25, 0
    %p94 = por %p92, %p93
    %s96 = sadd.s32 %s95, 1
    %p99 = scmp.eq.s32.totalorder %s19, 1
    %p100 = scmp.ne.s32.totalorder %s95, %s97
    %p101 = scmp.eq.s32.totalorder %s19, 0
    %p102 = por %p100, %p101
    %p103 = scmp.ne.s32.totalorder %s95, %s97
    %p104 = scmp.eq.s32.totalorder %s24, 1
    %p105 = por %p103, %p104
    %p106 = scmp.ne.s32.totalorder %s97, %s98
    %p107 = scmp.eq.s32.totalorder %s24, 0
    %p108 = por %p106, %p107
    %p109 = scmp.ne.s32.totalorder %s97, %s98
    %p110 = scmp.eq.s32.totalorder %s25, 1
    %p111 = por %p109, %p110
    %p113 = scmp.ne.s32.totalorder %s98, %s112
    %p114 = scmp.eq.s32.totalorder %s25, 0
    %p115 = por %p113, %p114
    %s117 = sadd.s32 %s116, 1
    %p120 = scmp.eq.s32.totalorder %s19, 1
    %p121 = scmp.ne.s32.totalorder %s116, %s118
    %p122 = scmp.eq.s32.totalorder %s19, 0
    %p123 = por %p121, %p122
    %p124 = scmp.ne.s32.totalorder %s116, %s118
    %p125 = scmp.eq.s32.totalorder %s24, 1
    %p126 = por %p124, %p125
    %p127 = scmp.ne.s32.totalorder %s118, %s119
    %p128 = scmp.eq.s32.totalorder %s24, 0
    %p129 = por %p127, %p128
    %p130 = scmp.ne.s32.totalorder %s118, %s119
    %p131 = scmp.eq.s32.totalorder %s25, 1
    %p132 = por %p130, %p131
    %p134 = scmp.ne.s32.totalorder %s119, %s133
    %p135 = scmp.eq.s32.totalorder %s25, 0
    %p136 = por %p134, %p135
    %s138 = sadd.s32 %s137, 1
    %p141 = scmp.eq.s32.totalorder %s19, 1
    %p142 = scmp.ne.s32.totalorder %s137, %s139
    %p143 = scmp.eq.s32.totalorder %s19, 0
    %p144 = por %p142, %p143
    %p145 = scmp.ne.s32.totalorder %s137, %s139
    %p146 = scmp.eq.s32.totalorder %s24, 1
    %p147 = por %p145, %p146
    %p148 = scmp.ne.s32.totalorder %s139, %s140
    %p149 = scmp.eq.s32.totalorder %s24, 0
    %p150 = por %p148, %p149
    %p151 = scmp.ne.s32.totalorder %s139, %s140
    %p152 = scmp.eq.s32.totalorder %s25, 1
    %p153 = por %p151, %p152
    %p155 = scmp.ne.s32.totalorder %s140, %s154
    %p156 = scmp.eq.s32.totalorder %s25, 0
    %p157 = por %p155, %p156
    %s159 = sadd.s32 %s158, 1
    %p162 = scmp.eq.s32.totalorder %s19, 1
    %p163 = scmp.ne.s32.totalorder %s158, %s160
    %p164 = scmp.eq.s32.totalorder %s19, 0
    %p165 = por %p163, %p164
    %p166 = scmp.ne.s32.totalorder %s158, %s160
    %p167 = scmp.eq.s32.totalorder %s24, 1
    %p168 = por %p166, %p167
    %p169 = scmp.ne.s32.totalorder %s160, %s161
    %p170 = scmp.eq.s32.totalorder %s24, 0
    %p171 = por %p169, %p170
    %p172 = scmp.ne.s32.totalorder %s160, %s161
    %p173 = scmp.eq.s32.totalorder %s25, 1
    %p174 = por %p172, %p173
    %p176 = scmp.ne.s32.totalorder %s161, %s175
    %p177 = scmp.eq.s32.totalorder %s25, 0
    %p178 = por %p176, %p177
    %s180 = sadd.s32 %s179, 1
    %p183 = scmp.eq.s32.totalorder %s19, 1
    %p184 = scmp.ne.s32.totalorder %s179, %s181
    %p185 = scmp.eq.s32.totalorder %s19, 0
    %p186 = por %p184, %p185
    %p187 = scmp.ne.s32.totalorder %s179, %s181
    %p188 = scmp.eq.s32.totalorder %s24, 1
    %p189 = por %p187, %p188
    %p190 = scmp.ne.s32.totalorder %s181, %s182
    %p191 = scmp.eq.s32.totalorder %s24, 0
    %p192 = por %p190, %p191
    %p193 = scmp.ne.s32.totalorder %s181, %s182
    %p194 = scmp.eq.s32.totalorder %s25, 1
    %p195 = por %p193, %p194
    %p197 = scmp.ne.s32.totalorder %s182, %s196
    %p198 = scmp.eq.s32.totalorder %s25, 0
    %p199 = por %p197, %p198
    %s201 = sadd.s32 %s200, 1
    %p204 = scmp.eq.s32.totalorder %s19, 1
    %p205 = scmp.ne.s32.totalorder %s200, %s202
    %p206 = scmp.eq.s32.totalorder %s19, 0
    %p207 = por %p205, %p206
    %p208 = scmp.ne.s32.totalorder %s200, %s202
    %p209 = scmp.eq.s32.totalorder %s24, 1
    %p210 = por %p208, %p209
    %p211 = scmp.ne.s32.totalorder %s202, %s203
    %p212 = scmp.eq.s32.totalorder %s24, 0
    %p213 = por %p211, %p212
    %p214 = scmp.ne.s32.totalorder %s202, %s203
    %p215 = scmp.eq.s32.totalorder %s25, 1
    %p216 = por %p214, %p215
    %p218 = scmp.ne.s32.totalorder %s203, %s217
    %p219 = scmp.eq.s32.totalorder %s25, 0
    %p220 = por %p218, %p219
    %s222 = sadd.s32 %s221, 1
    %p225 = scmp.eq.s32.totalorder %s19, 1
    %p226 = scmp.ne.s32.totalorder %s221, %s223
    %p227 = scmp.eq.s32.totalorder %s19, 0
    %p228 = por %p226, %p227
    %p229 = scmp.ne.s32.totalorder %s221, %s223
    %p230 = scmp.eq.s32.totalorder %s24, 1
    %p231 = por %p229, %p230
    %p232 = scmp.ne.s32.totalorder %s223, %s224
    %p233 = scmp.eq.s32.totalorder %s24, 0
    %p234 = por %p232, %p233
    %p235 = scmp.ne.s32.totalorder %s223, %s224
    %p236 = scmp.eq.s32.totalorder %s25, 1
    %p237 = por %p235, %p236
    %p239 = scmp.ne.s32.totalorder %s224, %s238
    %p240 = scmp.eq.s32.totalorder %s25, 0
    %p241 = por %p239, %p240
    %s243 = sadd.s32 %s242, 1
    %p246 = scmp.eq.s32.totalorder %s19, 1
    %p247 = scmp.ne.s32.totalorder %s242, %s244
    %p248 = scmp.eq.s32.totalorder %s19, 0
    %p249 = por %p247, %p248
    %p250 = scmp.ne.s32.totalorder %s242, %s244
    %p251 = scmp.eq.s32.totalorder %s24, 1
    %p252 = por %p250, %p251
    %p253 = scmp.ne.s32.totalorder %s244, %s245
    %p254 = scmp.eq.s32.totalorder %s24, 0
    %p255 = por %p253, %p254
    %p256 = scmp.ne.s32.totalorder %s244, %s245
    %p257 = scmp.eq.s32.totalorder %s25, 1
    %p258 = por %p256, %p257
    %p260 = scmp.ne.s32.totalorder %s245, %s259
    %p261 = scmp.eq.s32.totalorder %s25, 0
    %p262 = por %p260, %p261
    %s264 = sadd.s32 %s263, 1
    %p267 = scmp.eq.s32.totalorder %s19, 1
    %p268 = scmp.ne.s32.totalorder %s263, %s265
    %p269 = scmp.eq.s32.totalorder %s19, 0
    %p270 = por %p268, %p269
    %p271 = scmp.ne.s32.totalorder %s263, %s265
    %p272 = scmp.eq.s32.totalorder %s24, 1
    %p273 = por %p271, %p272
    %p274 = scmp.ne.s32.totalorder %s265, %s266
    %p275 = scmp.eq.s32.totalorder %s24, 0
    %p276 = por %p274, %p275
    %p277 = scmp.ne.s32.totalorder %s265, %s266
    %p278 = scmp.eq.s32.totalorder %s25, 1
    %p279 = por %p277, %p278
    %p281 = scmp.ne.s32.totalorder %s266, %s280
    %p282 = scmp.eq.s32.totalorder %s25, 0
    %p283 = por %p281, %p282
    %s285 = sadd.s32 %s284, 1
    %p288 = scmp.eq.s32.totalorder %s19, 1
    %p289 = scmp.ne.s32.totalorder %s284, %s286
    %p290 = scmp.eq.s32.totalorder %s19, 0
    %p291 = por %p289, %p290
    %p292 = scmp.ne.s32.totalorder %s284, %s286
    %p293 = scmp.eq.s32.totalorder %s24, 1
    %p294 = por %p292, %p293
    %p295 = scmp.ne.s32.totalorder %s286, %s287
    %p296 = scmp.eq.s32.totalorder %s24, 0
    %p297 = por %p295, %p296
    %p298 = scmp.ne.s32.totalorder %s286, %s287
    %p299 = scmp.eq.s32.totalorder %s25, 1
    %p300 = por %p298, %p299
    %p302 = scmp.ne.s32.totalorder %s287, %s301
    %p303 = scmp.eq.s32.totalorder %s25, 0
    %p304 = por %p302, %p303
    %s305 = ssub.s32 %s19, %s26
    %p306 = scmp.eq.s32.totalorder %s305, 0
    %s308 = sadd.s32 %s307, 1
    %s309 = scalar_select %p306, %s307, %s308
    %p312 = pneg %p306
    %p313 = scmp.eq.s32.totalorder %s19, 1
    %p314 = por %p312, %p313
    %p315 = scmp.ne.s32.totalorder %s307, %s310
    %p316 = scmp.eq.s32.totalorder %s19, 0
    %p317 = por %p315, %p316
    %p318 = scmp.ne.s32.totalorder %s307, %s310
    %p319 = scmp.eq.s32.totalorder %s24, 1
    %p320 = por %p318, %p319
    %p321 = scmp.ne.s32.totalorder %s310, %s311
    %p322 = scmp.eq.s32.totalorder %s24, 0
    %p323 = por %p321, %p322
    %p324 = scmp.ne.s32.totalorder %s310, %s311
    %p325 = scmp.eq.s32.totalorder %s25, 1
    %p326 = por %p324, %p325
    %p328 = scmp.ne.s32.totalorder %s311, %s327
    %p329 = scmp.eq.s32.totalorder %s25, 0
    %p330 = por %p328, %p329
    %p331 = scmp.le.s32.totalorder 1, %s19
    %p332 = scmp.lt.s32.totalorder %s19, 3
    %p333 = pnand %p331, %p332
    %p334 = pneg %p333
    // Predicated region
    $region9: #{clip_forward.8} parent=5 // pred_check
      _
    $region10: #{clip_forward.8} parent=5 // pred_check_branch
      %336 = sbr.rel (%p333) target = $region12
    $region11: #{clip_forward.8} parent=5 // pred_region
      %s337 = ssub.s32 %s19, 1
      // Predicated region
      $region13: #{clip_forward.8} parent=11 // pred_check
        %p338 = pneg %p66
      $region14: #{clip_forward.8} parent=11 // pred_check_branch
        %340 = sbr.rel (%p338) target = $region16
      $region15: #{clip_forward.8} parent=11 // pred_region
        _
      $region16: #{clip_forward.8} parent=11 // pred_fallthru
        _
      // Predicated region
      $region17: #{clip_forward.8} parent=11 // pred_check
        %p341 = pneg %p87
      $region18: #{clip_forward.8} parent=11 // pred_check_branch
        %343 = sbr.rel (%p341) target = $region20
      $region19: #{clip_forward.8} parent=11 // pred_region
        _
      $region20: #{clip_forward.8} parent=11 // pred_fallthru
        _
      // Predicated region
      $region21: #{clip_forward.8} parent=11 // pred_check
        %p344 = pneg %p108
      $region22: #{clip_forward.8} parent=11 // pred_check_branch
        %346 = sbr.rel (%p344) target = $region24
      $region23: #{clip_forward.8} parent=11 // pred_region
        _
      $region24: #{clip_forward.8} parent=11 // pred_fallthru
        _
      // Predicated region
      $region25: #{clip_forward.8} parent=11 // pred_check
        %p347 = pneg %p129
      $region26: #{clip_forward.8} parent=11 // pred_check_branch
        %349 = sbr.rel (%p347) target = $region28
      $region27: #{clip_forward.8} parent=11 // pred_region
        _
      $region28: #{clip_forward.8} parent=11 // pred_fallthru
        _
      // Predicated region
      $region29: #{clip_forward.8} parent=11 // pred_check
        %p350 = pneg %p150
      $region30: #{clip_forward.8} parent=11 // pred_check_branch
        %352 = sbr.rel (%p350) target = $region32
      $region31: #{clip_forward.8} parent=11 // pred_region
        _
      $region32: #{clip_forward.8} parent=11 // pred_fallthru
        _
      // Predicated region
      $region33: #{clip_forward.8} parent=11 // pred_check
        %p353 = pneg %p171
      $region34: #{clip_forward.8} parent=11 // pred_check_branch
        %355 = sbr.rel (%p353) target = $region36
      $region35: #{clip_forward.8} parent=11 // pred_region
        _
      $region36: #{clip_forward.8} parent=11 // pred_fallthru
        _
      // Predicated region
      $region37: #{clip_forward.8} parent=11 // pred_check
        %p356 = pneg %p192
      $region38: #{clip_forward.8} parent=11 // pred_check_branch
        %358 = sbr.rel (%p356) target = $region40
      $region39: #{clip_forward.8} parent=11 // pred_region
        _
      $region40: #{clip_forward.8} parent=11 // pred_fallthru
        _
      // Predicated region
      $region41: #{clip_forward.8} parent=11 // pred_check
        %p359 = pneg %p213
      $region42: #{clip_forward.8} parent=11 // pred_check_branch
        %361 = sbr.rel (%p359) target = $region44
      $region43: #{clip_forward.8} parent=11 // pred_region
        _
      $region44: #{clip_forward.8} parent=11 // pred_fallthru
        _
      // Predicated region
      $region45: #{clip_forward.8} parent=11 // pred_check
        %p362 = pneg %p234
      $region46: #{clip_forward.8} parent=11 // pred_check_branch
        %364 = sbr.rel (%p362) target = $region48
      $region47: #{clip_forward.8} parent=11 // pred_region
        _
      $region48: #{clip_forward.8} parent=11 // pred_fallthru
        _
      // Predicated region
      $region49: #{clip_forward.8} parent=11 // pred_check
        %p365 = pneg %p255
      $region50: #{clip_forward.8} parent=11 // pred_check_branch
        %367 = sbr.rel (%p365) target = $region52
      $region51: #{clip_forward.8} parent=11 // pred_region
        _
      $region52: #{clip_forward.8} parent=11 // pred_fallthru
        _
      // Predicated region
      $region53: #{clip_forward.8} parent=11 // pred_check
        %p368 = pneg %p276
      $region54: #{clip_forward.8} parent=11 // pred_check_branch
        %370 = sbr.rel (%p368) target = $region56
      $region55: #{clip_forward.8} parent=11 // pred_region
        _
      $region56: #{clip_forward.8} parent=11 // pred_fallthru
        _
      // Predicated region
      $region57: #{clip_forward.8} parent=11 // pred_check
        %p371 = pneg %p297
      $region58: #{clip_forward.8} parent=11 // pred_check_branch
        %373 = sbr.rel (%p371) target = $region60
      $region59: #{clip_forward.8} parent=11 // pred_region
        _
      $region60: #{clip_forward.8} parent=11 // pred_fallthru
        _
    $region12: #{clip_forward.8} parent=5 // pred_fallthru
      _
    %p374 = scmp.lt.s32.totalorder %s19, 2
    // Predicated region
    $region61: #{clip_forward.8} parent=5 // pred_check
      %p375 = pneg %p374
    $region62: #{clip_forward.8} parent=5 // pred_check_branch
      %377 = sbr.rel (%p375) target = $region64
    $region63: #{clip_forward.8} parent=5 // pred_region
      // Predicated region
      $region65: #{clip_forward.8} parent=63 // pred_check
        %p378 = pneg %p39
      $region66: #{clip_forward.8} parent=63 // pred_check_branch
        %380 = sbr.rel (%p378) target = $region68
      $region67: #{clip_forward.8} parent=63 // pred_region
        %s381 = smul.u32 2, %s19
        %p382 = scmp.lt.s32.totalorder %s381, 3
        %s383 = scalar_select %p382, %s381, 3
        %s384 = smul.addr %s383, 8
        %s385 = scalar_lea.vmem %s0, %s384
        %s386 = smul.u32 2, %s19
      $region68: #{clip_forward.8} parent=63 // pred_fallthru
        _
    $region64: #{clip_forward.8} parent=5 // pred_fallthru
      _
    %p387 = scmp.le.s32.totalorder 1, %s19
    %p388 = scmp.lt.s32.totalorder %s19, 3
    %p389 = pnand %p387, %p388
    %p390 = pneg %p389
    // Predicated region
    $region69: #{clip_forward.8} parent=5 // pred_check
      _
    $region70: #{clip_forward.8} parent=5 // pred_check_branch
      %392 = sbr.rel (%p389) target = $region72
    $region71: #{clip_forward.8} parent=5 // pred_region
      %s393 = ssub.s32 %s19, 1
      %s394 = smul.u32 2, %s24
      %p395 = scmp.lt.s32.totalorder %s394, 3
      %s396 = scalar_select %p395, %s394, 3
      %s397 = smul.addr %s396, 8
      %s398 = scalar_lea.vmem %s0, %s397
      %p399 = pneg %p45
      %p400 = pneg %p42
      %p401 = pneg %p66
      %p402 = pneg %p63
      %p403 = pneg %p87
      %p404 = pneg %p84
      %p405 = pneg %p108
      %p406 = pneg %p105
      %p407 = pneg %p129
      %p408 = pneg %p126
      %p409 = pneg %p150
      %p410 = pneg %p147
      %p411 = pneg %p171
      %p412 = pneg %p168
      %p413 = pneg %p192
      %p414 = pneg %p189
      %p415 = pneg %p213
      %p416 = pneg %p210
      %p417 = pneg %p234
      %p418 = pneg %p231
      %p419 = pneg %p255
      %p420 = pneg %p252
      %p421 = pneg %p276
      %p422 = pneg %p273
      %p423 = pneg %p297
      %p424 = pneg %p294
      %p425 = pneg %p323
      %p426 = pneg %p320
      %s427 = smul.u32 2, %s24
      %p428 = scmp.lt.s32.totalorder %s427, 3
      %s429 = scalar_select %p428, %s427, 3
      %s430 = smul.addr %s429, 8
      %s431 = scalar_lea.vmem %s13, %s430
      %s432 = smul.u32 2, %s24
      %p433 = scmp.lt.s32.totalorder %s432, 3
      %s434 = scalar_select %p433, %s432, 3
      %s435 = smul.addr %s434, 8
      %s436 = scalar_lea.vmem %s0, %s435
      %s437 = smul.u32 2, %s24
      %s438 = smul.u32 2, %s24
      %p439 = scmp.lt.s32.totalorder %s438, 3
      %s440 = scalar_select %p439, %s438, 3
      %s441 = smul.addr %s440, 8
      %s442 = scalar_lea.vmem %s13, %s441
      %s443 = smul.u32 2, %s24
      %v445 = vld [vmem:[%s436] sm:$0xff]
      %v446 = vld [vmem:[%s436 + $0x8] sm:$0xff]
      %v447 = vld [vmem:[%s1] sm:$0x1]
      %v448 = vld [vmem:[%s2] sm:$0x1]
      %vm449 = vcmask 261120
      %v450 = vsel %vm449, %v445, 0.0
      %451 = vadd.xlane.f32.xlu0 %v450
      %v452 = vpop.xlane.xlu0 %451
      %v453 = vsel %vm449, %v446, 0.0
      %454 = vadd.xlane.f32.xlu0 %v453
      %v455 = vpop.xlane.xlu0 %454
      %v456 = vrcp.pop 32.0
      %v457 = vmul.f32 32.0, %v456
      %v458 = vsub.f32 1.0, %v457
      %v459 = vmul.f32 %v456, %v458
      %v460 = vadd.f32 %v456, %v459
      %vm461 = vweird.f32 %v456
      %v462 = vsel %vm461, %v456, %v460
      %v463 = vmul.f32 %v452, %v462
      %v464 = vmul.f32 %v455, %v462
      %v465 = vsub.f32 %v445, %v463
      %v466 = vsub.f32 %v446, %v464
      %v467 = vmul.f32 %v465, %v465
      %v468 = vmul.f32 %v466, %v466
      %v469 = vsel %vm449, %v467, 0.0
      %470 = vadd.xlane.f32.xlu0 %v469
      %v471 = vpop.xlane.xlu0 %470
      %v472 = vsel %vm449, %v468, 0.0
      %473 = vadd.xlane.f32.xlu0 %v472
      %v474 = vpop.xlane.xlu0 %473
      %v475 = vmul.f32 %v471, %v462
      %v476 = vmul.f32 %v474, %v462
      %v477 = vadd.f32 %v475, 1e-05
      %v478 = vadd.f32 %v476, 1e-05
      %v479 = vrsqrt.pop %v477
      %v480 = vmul.f32 %v479, %v477
      %v481 = vmul.f32 %v480, %v479
      %v482 = vmul.f32 0.5, %v481
      %v483 = vsub.f32 1.5, %v482
      %v484 = vmul.f32 %v479, %v483
      %vm485 = vweird.f32 %v477
      %vm486 = vweird.f32 %v479
      %vm487 = vmor %vm485, %vm486
      %v488 = vsel %vm487, %v479, %v484
      %v489 = vrsqrt.pop %v478
      %v490 = vmul.f32 %v489, %v478
      %v491 = vmul.f32 %v490, %v489
      %v492 = vmul.f32 0.5, %v491
      %v493 = vsub.f32 1.5, %v492
      %v494 = vmul.f32 %v489, %v493
      %vm495 = vweird.f32 %v478
      %vm496 = vweird.f32 %v489
      %vm497 = vmor %vm495, %vm496
      %v498 = vsel %vm497, %v489, %v494
      %v499 = vmul.f32 %v465, %v488
      %v500 = vmul.f32 %v466, %v498
      %v502 = vperm.slane %v447, 0
      %v504 = vmul.f32 %v499, %v502
      %v505 = vmul.f32 %v500, %v502
      %v507 = vperm.slane %v448, 0
      %v509 = vadd.f32 %v504, %v507
      %v510 = vadd.f32 %v505, %v507
      %v511 = vpack.c.bf16 %v510, %v509
      %v512 = vld [vmem:[%s3] sm:$0xf]
      %v513 = vld [vmem:[%s3 + $0x4] sm:$0xf]
      %v514 = vld [vmem:[%s3 + $0x8] sm:$0xf]
      %v515 = vld [vmem:[%s3 + $0xc] sm:$0xf]
      %v516 = vld [vmem:[%s4] sm:$0x1]
      %v518 = vperm.slane %v516, 0
      %v524 = vunpack.c.l.b16 %v512
      %v525 = vunpack.c.l.b16 %v513
      %v526 = vunpack.c.l.b16 %v514
      %v527 = vunpack.c.l.b16 %v515
      %v528 = vpack.c.b16 %v525, %v524
      %v529 = vpack.c.b16 %v527, %v526
      %v533 = vsel %vm449, %v511, 0
      %535 = vmatpush.bf16.msra.mxu0 0
      %536 = vmatpush.bf16.msra.mxu0 0
      %537 = vmatpush.bf16.msra.mxu0 0
      %538 = vmatpush.bf16.msra.mxu0 0
      %539 = vmatpush.bf16.msra.mxu0 0
      %540 = vmatpush.bf16.msra.mxu0 0
      %541 = vmatpush.bf16.msra.mxu0 %v529
      %542 = vmatpush.bf16.msra.mxu0 %v528
      %543 = vmatmul.bf16.gmra.mxu0 %v533
      %v544 = vpop.f32.mrf.mxu0
      %v545 = vadd.f32 %v518, %v544
      %v546 = vpop.f32.mrf.mxu0
      %v547 = vadd.f32 %v518, %v546
      %548 = vdwg.mxu0
      %551 = vrot.lane.b32.xlu0 %v545, 120
      %v552 = vpop.permute.xlu0 %551
      %553 = vrot.lane.b32.xlu0 %v547, 120
      %v554 = vpop.permute.xlu0 %553
      %557 = vrot.lane.b32.xlu0 %v545, 112
      %v558 = vpop.permute.xlu0 %557
      %559 = vrot.lane.b32.xlu0 %v547, 112
      %v560 = vpop.permute.xlu0 %559
      %563 = vrot.lane.b32.xlu0 %v545, 104
      %v564 = vpop.permute.xlu0 %563
      %565 = vrot.lane.b32.xlu0 %v547, 104
      %v566 = vpop.permute.xlu0 %565
      %v569 = vrot.slane %v558, 4
      %vm570 = vcmask 1047556
      %v571 = vsel %vm570, %v569, %v545
      %v572 = vrot.slane %v545, 4
      %v573 = vsel %vm570, %v558, %v572
      %v575 = vunpack.c.l.s4 1983009808
      %v576 = vunpack.c.0.s8 %v575
      %v577 = vperm.slane %v571, %v576
      %v579 = vunpack.c.l.s4 1983009808
      %v580 = vunpack.c.0.s8 %v579
      %v581 = vperm.slane %v573, %v580
      %v582 = vrot.slane %v564, 4
      %v583 = vsel %vm570, %v582, %v552
      %v584 = vrot.slane %v552, 4
      %v585 = vsel %vm570, %v564, %v584
      %v587 = vunpack.c.l.s4 1983009808
      %v588 = vunpack.c.0.s8 %v587
      %v589 = vperm.slane %v583, %v588
      %v591 = vunpack.c.l.s4 1983009808
      %v592 = vunpack.c.0.s8 %v591
      %v593 = vperm.slane %v585, %v592
      %v594 = vrot.slane %v589, 4
      %v595 = vsel %vm570, %v594, %v577
      %v596 = vrot.slane %v577, 4
      %v597 = vsel %vm570, %v589, %v596
      %v599 = vunpack.c.l.s4 1934713408
      %v600 = vunpack.c.0.s8 %v599
      %v601 = vperm.slane %v595, %v600
      %v603 = vunpack.c.l.s4 1934713408
      %v604 = vunpack.c.0.s8 %v603
      %v605 = vperm.slane %v597, %v604
      %v606 = vrot.slane %v593, 4
      %v607 = vsel %vm570, %v606, %v581
      %v608 = vrot.slane %v581, 4
      %v609 = vsel %vm570, %v593, %v608
      %v611 = vunpack.c.l.s4 1934713408
      %v612 = vunpack.c.0.s8 %v611
      %v613 = vperm.slane %v607, %v612
      %v615 = vunpack.c.l.s4 1934713408
      %v616 = vunpack.c.0.s8 %v615
      %v617 = vperm.slane %v609, %v616
      %v618 = vrot.slane %v601, 4
      %v619 = vsel %vm570, 0.0, %v618
      %v620 = vrot.slane %v605, 4
      %v621 = vsel %vm570, 0.0, %v620
      %v622 = vrot.slane %v613, 4
      %v623 = vsel %vm570, 0.0, %v622
      %v624 = vrot.slane %v617, 4
      %v625 = vsel %vm570, 0.0, %v624
      %v626 = vrot.slane %v560, 4
      %v627 = vsel %vm570, %v626, %v547
      %v628 = vrot.slane %v547, 4
      %v629 = vsel %vm570, %v560, %v628
      %v631 = vunpack.c.l.s4 1983009808
      %v632 = vunpack.c.0.s8 %v631
      %v633 = vperm.slane %v627, %v632
      %v635 = vunpack.c.l.s4 1983009808
      %v636 = vunpack.c.0.s8 %v635
      %v637 = vperm.slane %v629, %v636
      %v638 = vrot.slane %v566, 4
      %v639 = vsel %vm570, %v638, %v554
      %v640 = vrot.slane %v554, 4
      %v641 = vsel %vm570, %v566, %v640
      %v643 = vunpack.c.l.s4 1983009808
      %v644 = vunpack.c.0.s8 %v643
      %v645 = vperm.slane %v639, %v644
      %v647 = vunpack.c.l.s4 1983009808
      %v648 = vunpack.c.0.s8 %v647
      %v649 = vperm.slane %v641, %v648
      %v650 = vrot.slane %v645, 4
      %v651 = vsel %vm570, %v650, %v633
      %v652 = vrot.slane %v633, 4
      %v653 = vsel %vm570, %v645, %v652
      %v655 = vunpack.c.l.s4 1934713408
      %v656 = vunpack.c.0.s8 %v655
      %v657 = vperm.slane %v651, %v656
      %v659 = vunpack.c.l.s4 1934713408
      %v660 = vunpack.c.0.s8 %v659
      %v661 = vperm.slane %v653, %v660
      %v662 = vrot.slane %v649, 4
      %v663 = vsel %vm570, %v662, %v637
      %v664 = vrot.slane %v637, 4
      %v665 = vsel %vm570, %v649, %v664
      %v667 = vunpack.c.l.s4 1934713408
      %v668 = vunpack.c.0.s8 %v667
      %v669 = vperm.slane %v663, %v668
      %v671 = vunpack.c.l.s4 1934713408
      %v672 = vunpack.c.0.s8 %v671
      %v673 = vperm.slane %v665, %v672
      %v674 = vrot.slane %v657, 4
      %v675 = vsel %vm570, 0.0, %v674
      %v676 = vrot.slane %v661, 4
      %v677 = vsel %vm570, 0.0, %v676
      %v678 = vrot.slane %v669, 4
      %v679 = vsel %vm570, 0.0, %v678
      %v680 = vrot.slane %v673, 4
      %v681 = vsel %vm570, 0.0, %v680
      %v682 = vsel %vm570, %v620, %v601
      %v684 = vunpack.c.l.s4 1983009808
      %v685 = vunpack.c.0.s8 %v684
      %v686 = vperm.slane %v682, %v685
      %v687 = vrot.slane %v621, 4
      %v688 = vsel %vm570, %v687, %v619
      %v690 = vunpack.c.l.s4 1983009808
      %v691 = vunpack.c.0.s8 %v690
      %v692 = vperm.slane %v688, %v691
      %v693 = vsel %vm570, %v624, %v613
      %v695 = vunpack.c.l.s4 1983009808
      %v696 = vunpack.c.0.s8 %v695
      %v697 = vperm.slane %v693, %v696
      %v698 = vrot.slane %v625, 4
      %v699 = vsel %vm570, %v698, %v623
      %v701 = vunpack.c.l.s4 1983009808
      %v702 = vunpack.c.0.s8 %v701
      %v703 = vperm.slane %v699, %v702
      %v704 = vrot.slane %v692, 4
      %v705 = vsel %vm570, %v704, %v686
      %v706 = vrot.slane %v686, 4
      %v707 = vsel %vm570, %v692, %v706
      %v709 = vunpack.c.l.s4 1934713408
      %v710 = vunpack.c.0.s8 %v709
      %v711 = vperm.slane %v705, %v710
      %v713 = vunpack.c.l.s4 1934713408
      %v714 = vunpack.c.0.s8 %v713
      %v715 = vperm.slane %v707, %v714
      %v716 = vrot.slane %v703, 4
      %v717 = vsel %vm570, %v716, %v697
      %v718 = vrot.slane %v697, 4
      %v719 = vsel %vm570, %v703, %v718
      %v721 = vunpack.c.l.s4 1934713408
      %v722 = vunpack.c.0.s8 %v721
      %v723 = vperm.slane %v717, %v722
      %v725 = vunpack.c.l.s4 1934713408
      %v726 = vunpack.c.0.s8 %v725
      %v727 = vperm.slane %v719, %v726
      %v728 = vrot.slane %v723, 4
      %v729 = vsel %vm570, %v728, %v711
      %v730 = vrot.slane %v711, 4
      %v731 = vsel %vm570, %v723, %v730
      %v732 = vrot.slane %v727, 4
      %v733 = vsel %vm570, %v732, %v715
      %v734 = vrot.slane %v715, 4
      %v735 = vsel %vm570, %v727, %v734
      %v736 = vsel %vm570, %v676, %v657
      %v738 = vunpack.c.l.s4 1983009808
      %v739 = vunpack.c.0.s8 %v738
      %v740 = vperm.slane %v736, %v739
      %v741 = vrot.slane %v677, 4
      %v742 = vsel %vm570, %v741, %v675
      %v744 = vunpack.c.l.s4 1983009808
      %v745 = vunpack.c.0.s8 %v744
      %v746 = vperm.slane %v742, %v745
      %v747 = vsel %vm570, %v680, %v669
      %v749 = vunpack.c.l.s4 1983009808
      %v750 = vunpack.c.0.s8 %v749
      %v751 = vperm.slane %v747, %v750
      %v752 = vrot.slane %v681, 4
      %v753 = vsel %vm570, %v752, %v679
      %v755 = vunpack.c.l.s4 1983009808
      %v756 = vunpack.c.0.s8 %v755
      %v757 = vperm.slane %v753, %v756
      %v758 = vrot.slane %v746, 4
      %v759 = vsel %vm570, %v758, %v740
      %v760 = vrot.slane %v740, 4
      %v761 = vsel %vm570, %v746, %v760
      %v763 = vunpack.c.l.s4 1934713408
      %v764 = vunpack.c.0.s8 %v763
      %v765 = vperm.slane %v759, %v764
      %v767 = vunpack.c.l.s4 1934713408
      %v768 = vunpack.c.0.s8 %v767
      %v769 = vperm.slane %v761, %v768
      %v770 = vrot.slane %v757, 4
      %v771 = vsel %vm570, %v770, %v751
      %v772 = vrot.slane %v751, 4
      %v773 = vsel %vm570, %v757, %v772
      %v775 = vunpack.c.l.s4 1934713408
      %v776 = vunpack.c.0.s8 %v775
      %v777 = vperm.slane %v771, %v776
      %v779 = vunpack.c.l.s4 1934713408
      %v780 = vunpack.c.0.s8 %v779
      %v781 = vperm.slane %v773, %v780
      %v782 = vrot.slane %v777, 4
      %v783 = vsel %vm570, %v782, %v765
      %v784 = vrot.slane %v765, 4
      %v785 = vsel %vm570, %v777, %v784
      %v786 = vrot.slane %v781, 4
      %v787 = vsel %vm570, %v786, %v769
      %v788 = vrot.slane %v769, 4
      %v789 = vsel %vm570, %v781, %v788
      %v790 = vpack.c.bf16 %v729, %v729
      %v791 = vpack.c.bf16 %v731, %v731
      %v792 = vpack.c.bf16 %v733, %v733
      %v793 = vpack.c.bf16 %v735, %v735
      %v794 = vpack.c.bf16 %v783, %v783
      %v795 = vpack.c.bf16 %v785, %v785
      %v796 = vpack.c.bf16 %v787, %v787
      %v797 = vpack.c.bf16 %v789, %v789
      %798 = vrot.lane.b32.xlu0 %v545, 96
      %v799 = vpop.permute.xlu0 %798
      %800 = vrot.lane.b32.xlu0 %v547, 96
      %v801 = vpop.permute.xlu0 %800
      %802 = vrot.lane.b32.xlu0 %v552, 96
      %v803 = vpop.permute.xlu0 %802
      %804 = vrot.lane.b32.xlu0 %v554, 96
      %v805 = vpop.permute.xlu0 %804
      %806 = vrot.lane.b32.xlu0 %v558, 96
      %v807 = vpop.permute.xlu0 %806
      %808 = vrot.lane.b32.xlu0 %v560, 96
      %v809 = vpop.permute.xlu0 %808
      %810 = vrot.lane.b32.xlu0 %v564, 96
      %v811 = vpop.permute.xlu0 %810
      %812 = vrot.lane.b32.xlu0 %v566, 96
      %v813 = vpop.permute.xlu0 %812
      %v822 = vrot.slane %v807, 4
      %v823 = vsel %vm570, %v822, %v799
      %v824 = vrot.slane %v799, 4
      %v825 = vsel %vm570, %v807, %v824
      %v827 = vunpack.c.l.s4 1983009808
      %v828 = vunpack.c.0.s8 %v827
      %v829 = vperm.slane %v823, %v828
      %v831 = vunpack.c.l.s4 1983009808
      %v832 = vunpack.c.0.s8 %v831
      %v833 = vperm.slane %v825, %v832
      %v834 = vrot.slane %v811, 4
      %v835 = vsel %vm570, %v834, %v803
      %v836 = vrot.slane %v803, 4
      %v837 = vsel %vm570, %v811, %v836
      %v839 = vunpack.c.l.s4 1983009808
      %v840 = vunpack.c.0.s8 %v839
      %v841 = vperm.slane %v835, %v840
      %v843 = vunpack.c.l.s4 1983009808
      %v844 = vunpack.c.0.s8 %v843
      %v845 = vperm.slane %v837, %v844
      %v846 = vrot.slane %v841, 4
      %v847 = vsel %vm570, %v846, %v829
      %v848 = vrot.slane %v829, 4
      %v849 = vsel %vm570, %v841, %v848
      %v851 = vunpack.c.l.s4 1934713408
      %v852 = vunpack.c.0.s8 %v851
      %v853 = vperm.slane %v847, %v852
      %v855 = vunpack.c.l.s4 1934713408
      %v856 = vunpack.c.0.s8 %v855
      %v857 = vperm.slane %v849, %v856
      %v858 = vrot.slane %v845, 4
      %v859 = vsel %vm570, %v858, %v833
      %v860 = vrot.slane %v833, 4
      %v861 = vsel %vm570, %v845, %v860
      %v863 = vunpack.c.l.s4 1934713408
      %v864 = vunpack.c.0.s8 %v863
      %v865 = vperm.slane %v859, %v864
      %v867 = vunpack.c.l.s4 1934713408
      %v868 = vunpack.c.0.s8 %v867
      %v869 = vperm.slane %v861, %v868
      %v870 = vrot.slane %v853, 4
      %v871 = vsel %vm570, 0.0, %v870
      %v872 = vrot.slane %v857, 4
      %v873 = vsel %vm570, 0.0, %v872
      %v874 = vrot.slane %v865, 4
      %v875 = vsel %vm570, 0.0, %v874
      %v876 = vrot.slane %v869, 4
      %v877 = vsel %vm570, 0.0, %v876
      %v878 = vrot.slane %v809, 4
      %v879 = vsel %vm570, %v878, %v801
      %v880 = vrot.slane %v801, 4
      %v881 = vsel %vm570, %v809, %v880
      %v883 = vunpack.c.l.s4 1983009808
      %v884 = vunpack.c.0.s8 %v883
      %v885 = vperm.slane %v879, %v884
      %v887 = vunpack.c.l.s4 1983009808
      %v888 = vunpack.c.0.s8 %v887
      %v889 = vperm.slane %v881, %v888
      %v890 = vrot.slane %v813, 4
      %v891 = vsel %vm570, %v890, %v805
      %v892 = vrot.slane %v805, 4
      %v893 = vsel %vm570, %v813, %v892
      %v895 = vunpack.c.l.s4 1983009808
      %v896 = vunpack.c.0.s8 %v895
      %v897 = vperm.slane %v891, %v896
      %v899 = vunpack.c.l.s4 1983009808
      %v900 = vunpack.c.0.s8 %v899
      %v901 = vperm.slane %v893, %v900
      %v902 = vrot.slane %v897, 4
      %v903 = vsel %vm570, %v902, %v885
      %v904 = vrot.slane %v885, 4
      %v905 = vsel %vm570, %v897, %v904
      %v907 = vunpack.c.l.s4 1934713408
      %v908 = vunpack.c.0.s8 %v907
      %v909 = vperm.slane %v903, %v908
      %v911 = vunpack.c.l.s4 1934713408
      %v912 = vunpack.c.0.s8 %v911
      %v913 = vperm.slane %v905, %v912
      %v914 = vrot.slane %v901, 4
      %v915 = vsel %vm570, %v914, %v889
      %v916 = vrot.slane %v889, 4
      %v917 = vsel %vm570, %v901, %v916
      %v919 = vunpack.c.l.s4 1934713408
      %v920 = vunpack.c.0.s8 %v919
      %v921 = vperm.slane %v915, %v920
      %v923 = vunpack.c.l.s4 1934713408
      %v924 = vunpack.c.0.s8 %v923
      %v925 = vperm.slane %v917, %v924
      %v926 = vrot.slane %v909, 4
      %v927 = vsel %vm570, 0.0, %v926
      %v928 = vrot.slane %v913, 4
      %v929 = vsel %vm570, 0.0, %v928
      %v930 = vrot.slane %v921, 4
      %v931 = vsel %vm570, 0.0, %v930
      %v932 = vrot.slane %v925, 4
      %v933 = vsel %vm570, 0.0, %v932
      %v934 = vsel %vm570, %v872, %v853
      %v936 = vunpack.c.l.s4 1983009808
      %v937 = vunpack.c.0.s8 %v936
      %v938 = vperm.slane %v934, %v937
      %v939 = vrot.slane %v873, 4
      %v940 = vsel %vm570, %v939, %v871
      %v942 = vunpack.c.l.s4 1983009808
      %v943 = vunpack.c.0.s8 %v942
      %v944 = vperm.slane %v940, %v943
      %v945 = vsel %vm570, %v876, %v865
      %v947 = vunpack.c.l.s4 1983009808
      %v948 = vunpack.c.0.s8 %v947
      %v949 = vperm.slane %v945, %v948
      %v950 = vrot.slane %v877, 4
      %v951 = vsel %vm570, %v950, %v875
      %v953 = vunpack.c.l.s4 1983009808
      %v954 = vunpack.c.0.s8 %v953
      %v955 = vperm.slane %v951, %v954
      %v956 = vrot.slane %v944, 4
      %v957 = vsel %vm570, %v956, %v938
      %v958 = vrot.slane %v938, 4
      %v959 = vsel %vm570, %v944, %v958
      %v961 = vunpack.c.l.s4 1934713408
      %v962 = vunpack.c.0.s8 %v961
      %v963 = vperm.slane %v957, %v962
      %v965 = vunpack.c.l.s4 1934713408
      %v966 = vunpack.c.0.s8 %v965
      %v967 = vperm.slane %v959, %v966
      %v968 = vrot.slane %v955, 4
      %v969 = vsel %vm570, %v968, %v949
      %v970 = vrot.slane %v949, 4
      %v971 = vsel %vm570, %v955, %v970
      %v973 = vunpack.c.l.s4 1934713408
      %v974 = vunpack.c.0.s8 %v973
      %v975 = vperm.slane %v969, %v974
      %v977 = vunpack.c.l.s4 1934713408
      %v978 = vunpack.c.0.s8 %v977
      %v979 = vperm.slane %v971, %v978
      %v980 = vrot.slane %v975, 4
      %v981 = vsel %vm570, %v980, %v963
      %v982 = vrot.slane %v963, 4
      %v983 = vsel %vm570, %v975, %v982
      %v984 = vrot.slane %v979, 4
      %v985 = vsel %vm570, %v984, %v967
      %v986 = vrot.slane %v967, 4
      %v987 = vsel %vm570, %v979, %v986
      %v988 = vsel %vm570, %v928, %v909
      %v990 = vunpack.c.l.s4 1983009808
      %v991 = vunpack.c.0.s8 %v990
      %v992 = vperm.slane %v988, %v991
      %v993 = vrot.slane %v929, 4
      %v994 = vsel %vm570, %v993, %v927
      %v996 = vunpack.c.l.s4 1983009808
      %v997 = vunpack.c.0.s8 %v996
      %v998 = vperm.slane %v994, %v997
      %v999 = vsel %vm570, %v932, %v921
      %v1001 = vunpack.c.l.s4 1983009808
      %v1002 = vunpack.c.0.s8 %v1001
      %v1003 = vperm.slane %v999, %v1002
      %v1004 = vrot.slane %v933, 4
      %v1005 = vsel %vm570, %v1004, %v931
      %v1007 = vunpack.c.l.s4 1983009808
      %v1008 = vunpack.c.0.s8 %v1007
      %v1009 = vperm.slane %v1005, %v1008
      %v1010 = vrot.slane %v998, 4
      %v1011 = vsel %vm570, %v1010, %v992
      %v1012 = vrot.slane %v992, 4
      %v1013 = vsel %vm570, %v998, %v1012
      %v1015 = vunpack.c.l.s4 1934713408
      %v1016 = vunpack.c.0.s8 %v1015
      %v1017 = vperm.slane %v1011, %v1016
      %v1019 = vunpack.c.l.s4 1934713408
      %v1020 = vunpack.c.0.s8 %v1019
      %v1021 = vperm.slane %v1013, %v1020
      %v1022 = vrot.slane %v1009, 4
      %v1023 = vsel %vm570, %v1022, %v1003
      %v1024 = vrot.slane %v1003, 4
      %v1025 = vsel %vm570, %v1009, %v1024
      %v1027 = vunpack.c.l.s4 1934713408
      %v1028 = vunpack.c.0.s8 %v1027
      %v1029 = vperm.slane %v1023, %v1028
      %v1031 = vunpack.c.l.s4 1934713408
      %v1032 = vunpack.c.0.s8 %v1031
      %v1033 = vperm.slane %v1025, %v1032
      %v1034 = vrot.slane %v1029, 4
      %v1035 = vsel %vm570, %v1034, %v1017
      %v1036 = vrot.slane %v1017, 4
      %v1037 = vsel %vm570, %v1029, %v1036
      %v1038 = vrot.slane %v1033, 4
      %v1039 = vsel %vm570, %v1038, %v1021
      %v1040 = vrot.slane %v1021, 4
      %v1041 = vsel %vm570, %v1033, %v1040
      %v1042 = vpack.c.bf16 %v981, %v981
      %v1043 = vpack.c.bf16 %v983, %v983
      %v1044 = vpack.c.bf16 %v985, %v985
      %v1045 = vpack.c.bf16 %v987, %v987
      %v1046 = vpack.c.bf16 %v1035, %v1035
      %v1047 = vpack.c.bf16 %v1037, %v1037
      %v1048 = vpack.c.bf16 %v1039, %v1039
      %v1049 = vpack.c.bf16 %v1041, %v1041
      %1050 = vrot.lane.b32.xlu0 %v545, 64
      %v1051 = vpop.permute.xlu0 %1050
      %1052 = vrot.lane.b32.xlu0 %v547, 64
      %v1053 = vpop.permute.xlu0 %1052
      %1054 = vrot.lane.b32.xlu0 %v552, 64
      %v1055 = vpop.permute.xlu0 %1054
      %1056 = vrot.lane.b32.xlu0 %v554, 64
      %v1057 = vpop.permute.xlu0 %1056
      %1058 = vrot.lane.b32.xlu0 %v558, 64
      %v1059 = vpop.permute.xlu0 %1058
      %1060 = vrot.lane.b32.xlu0 %v560, 64
      %v1061 = vpop.permute.xlu0 %1060
      %1062 = vrot.lane.b32.xlu0 %v564, 64
      %v1063 = vpop.permute.xlu0 %1062
      %1064 = vrot.lane.b32.xlu0 %v566, 64
      %v1065 = vpop.permute.xlu0 %1064
      %v1074 = vrot.slane %v1059, 4
      %v1075 = vsel %vm570, %v1074, %v1051
      %v1076 = vrot.slane %v1051, 4
      %v1077 = vsel %vm570, %v1059, %v1076
      %v1079 = vunpack.c.l.s4 1983009808
      %v1080 = vunpack.c.0.s8 %v1079
      %v1081 = vperm.slane %v1075, %v1080
      %v1083 = vunpack.c.l.s4 1983009808
      %v1084 = vunpack.c.0.s8 %v1083
      %v1085 = vperm.slane %v1077, %v1084
      %v1086 = vrot.slane %v1063, 4
      %v1087 = vsel %vm570, %v1086, %v1055
      %v1088 = vrot.slane %v1055, 4
      %v1089 = vsel %vm570, %v1063, %v1088
      %v1091 = vunpack.c.l.s4 1983009808
      %v1092 = vunpack.c.0.s8 %v1091
      %v1093 = vperm.slane %v1087, %v1092
      %v1095 = vunpack.c.l.s4 1983009808
      %v1096 = vunpack.c.0.s8 %v1095
      %v1097 = vperm.slane %v1089, %v1096
      %v1098 = vrot.slane %v1093, 4
      %v1099 = vsel %vm570, %v1098, %v1081
      %v1100 = vrot.slane %v1081, 4
      %v1101 = vsel %vm570, %v1093, %v1100
      %v1103 = vunpack.c.l.s4 1934713408
      %v1104 = vunpack.c.0.s8 %v1103
      %v1105 = vperm.slane %v1099, %v1104
      %v1107 = vunpack.c.l.s4 1934713408
      %v1108 = vunpack.c.0.s8 %v1107
      %v1109 = vperm.slane %v1101, %v1108
      %v1110 = vrot.slane %v1097, 4
      %v1111 = vsel %vm570, %v1110, %v1085
      %v1112 = vrot.slane %v1085, 4
      %v1113 = vsel %vm570, %v1097, %v1112
      %v1115 = vunpack.c.l.s4 1934713408
      %v1116 = vunpack.c.0.s8 %v1115
      %v1117 = vperm.slane %v1111, %v1116
      %v1119 = vunpack.c.l.s4 1934713408
      %v1120 = vunpack.c.0.s8 %v1119
      %v1121 = vperm.slane %v1113, %v1120
      %v1122 = vrot.slane %v1105, 4
      %v1123 = vsel %vm570, 0.0, %v1122
      %v1124 = vrot.slane %v1109, 4
      %v1125 = vsel %vm570, 0.0, %v1124
      %v1126 = vrot.slane %v1117, 4
      %v1127 = vsel %vm570, 0.0, %v1126
      %v1128 = vrot.slane %v1121, 4
      %v1129 = vsel %vm570, 0.0, %v1128
      %v1130 = vrot.slane %v1061, 4
      %v1131 = vsel %vm570, %v1130, %v1053
      %v1132 = vrot.slane %v1053, 4
      %v1133 = vsel %vm570, %v1061, %v1132
      %v1135 = vunpack.c.l.s4 1983009808
      %v1136 = vunpack.c.0.s8 %v1135
      %v1137 = vperm.slane %v1131, %v1136
      %v1139 = vunpack.c.l.s4 1983009808
      %v1140 = vunpack.c.0.s8 %v1139
      %v1141 = vperm.slane %v1133, %v1140
      %v1142 = vrot.slane %v1065, 4
      %v1143 = vsel %vm570, %v1142, %v1057
      %v1144 = vrot.slane %v1057, 4
      %v1145 = vsel %vm570, %v1065, %v1144
      %v1147 = vunpack.c.l.s4 1983009808
      %v1148 = vunpack.c.0.s8 %v1147
      %v1149 = vperm.slane %v1143, %v1148
      %v1151 = vunpack.c.l.s4 1983009808
      %v1152 = vunpack.c.0.s8 %v1151
      %v1153 = vperm.slane %v1145, %v1152
      %v1154 = vrot.slane %v1149, 4
      %v1155 = vsel %vm570, %v1154, %v1137
      %v1156 = vrot.slane %v1137, 4
      %v1157 = vsel %vm570, %v1149, %v1156
      %v1159 = vunpack.c.l.s4 1934713408
      %v1160 = vunpack.c.0.s8 %v1159
      %v1161 = vperm.slane %v1155, %v1160
      %v1163 = vunpack.c.l.s4 1934713408
      %v1164 = vunpack.c.0.s8 %v1163
      %v1165 = vperm.slane %v1157, %v1164
      %v1166 = vrot.slane %v1153, 4
      %v1167 = vsel %vm570, %v1166, %v1141
      %v1168 = vrot.slane %v1141, 4
      %v1169 = vsel %vm570, %v1153, %v1168
      %v1171 = vunpack.c.l.s4 1934713408
      %v1172 = vunpack.c.0.s8 %v1171
      %v1173 = vperm.slane %v1167, %v1172
      %v1175 = vunpack.c.l.s4 1934713408
      %v1176 = vunpack.c.0.s8 %v1175
      %v1177 = vperm.slane %v1169, %v1176
      %v1178 = vrot.slane %v1161, 4
      %v1179 = vsel %vm570, 0.0, %v1178
      %v1180 = vrot.slane %v1165, 4
      %v1181 = vsel %vm570, 0.0, %v1180
      %v1182 = vrot.slane %v1173, 4
      %v1183 = vsel %vm570, 0.0, %v1182
      %v1184 = vrot.slane %v1177, 4
      %v1185 = vsel %vm570, 0.0, %v1184
      %v1186 = vsel %vm570, %v1124, %v1105
      %v1188 = vunpack.c.l.s4 1983009808
      %v1189 = vunpack.c.0.s8 %v1188
      %v1190 = vperm.slane %v1186, %v1189
      %v1191 = vrot.slane %v1125, 4
      %v1192 = vsel %vm570, %v1191, %v1123
      %v1194 = vunpack.c.l.s4 1983009808
      %v1195 = vunpack.c.0.s8 %v1194
      %v1196 = vperm.slane %v1192, %v1195
      %v1197 = vsel %vm570, %v1128, %v1117
      %v1199 = vunpack.c.l.s4 1983009808
      %v1200 = vunpack.c.0.s8 %v1199
      %v1201 = vperm.slane %v1197, %v1200
      %v1202 = vrot.slane %v1129, 4
      %v1203 = vsel %vm570, %v1202, %v1127
      %v1205 = vunpack.c.l.s4 1983009808
      %v1206 = vunpack.c.0.s8 %v1205
      %v1207 = vperm.slane %v1203, %v1206
      %v1208 = vrot.slane %v1196, 4
      %v1209 = vsel %vm570, %v1208, %v1190
      %v1210 = vrot.slane %v1190, 4
      %v1211 = vsel %vm570, %v1196, %v1210
      %v1213 = vunpack.c.l.s4 1934713408
      %v1214 = vunpack.c.0.s8 %v1213
      %v1215 = vperm.slane %v1209, %v1214
      %v1217 = vunpack.c.l.s4 1934713408
      %v1218 = vunpack.c.0.s8 %v1217
      %v1219 = vperm.slane %v1211, %v1218
      %v1220 = vrot.slane %v1207, 4
      %v1221 = vsel %vm570, %v1220, %v1201
      %v1222 = vrot.slane %v1201, 4
      %v1223 = vsel %vm570, %v1207, %v1222
      %v1225 = vunpack.c.l.s4 1934713408
      %v1226 = vunpack.c.0.s8 %v1225
      %v1227 = vperm.slane %v1221, %v1226
      %v1229 = vunpack.c.l.s4 1934713408
      %v1230 = vunpack.c.0.s8 %v1229
      %v1231 = vperm.slane %v1223, %v1230
      %v1232 = vrot.slane %v1227, 4
      %v1233 = vsel %vm570, %v1232, %v1215
      %v1234 = vrot.slane %v1215, 4
      %v1235 = vsel %vm570, %v1227, %v1234
      %v1236 = vrot.slane %v1231, 4
      %v1237 = vsel %vm570, %v1236, %v1219
      %v1238 = vrot.slane %v1219, 4
      %v1239 = vsel %vm570, %v1231, %v1238
      %v1240 = vsel %vm570, %v1180, %v1161
      %v1242 = vunpack.c.l.s4 1983009808
      %v1243 = vunpack.c.0.s8 %v1242
      %v1244 = vperm.slane %v1240, %v1243
      %v1245 = vrot.slane %v1181, 4
      %v1246 = vsel %vm570, %v1245, %v1179
      %v1248 = vunpack.c.l.s4 1983009808
      %v1249 = vunpack.c.0.s8 %v1248
      %v1250 = vperm.slane %v1246, %v1249
      %v1251 = vsel %vm570, %v1184, %v1173
      %v1253 = vunpack.c.l.s4 1983009808
      %v1254 = vunpack.c.0.s8 %v1253
      %v1255 = vperm.slane %v1251, %v1254
      %v1256 = vrot.slane %v1185, 4
      %v1257 = vsel %vm570, %v1256, %v1183
      %v1259 = vunpack.c.l.s4 1983009808
      %v1260 = vunpack.c.0.s8 %v1259
      %v1261 = vperm.slane %v1257, %v1260
      %v1262 = vrot.slane %v1250, 4
      %v1263 = vsel %vm570, %v1262, %v1244
      %v1264 = vrot.slane %v1244, 4
      %v1265 = vsel %vm570, %v1250, %v1264
      %v1267 = vunpack.c.l.s4 1934713408
      %v1268 = vunpack.c.0.s8 %v1267
      %v1269 = vperm.slane %v1263, %v1268
      %v1271 = vunpack.c.l.s4 1934713408
      %v1272 = vunpack.c.0.s8 %v1271
      %v1273 = vperm.slane %v1265, %v1272
      %v1274 = vrot.slane %v1261, 4
      %v1275 = vsel %vm570, %v1274, %v1255
      %v1276 = vrot.slane %v1255, 4
      %v1277 = vsel %vm570, %v1261, %v1276
      %v1279 = vunpack.c.l.s4 1934713408
      %v1280 = vunpack.c.0.s8 %v1279
      %v1281 = vperm.slane %v1275, %v1280
      %v1283 = vunpack.c.l.s4 1934713408
      %v1284 = vunpack.c.0.s8 %v1283
      %v1285 = vperm.slane %v1277, %v1284
      %v1286 = vrot.slane %v1281, 4
      %v1287 = vsel %vm570, %v1286, %v1269
      %v1288 = vrot.slane %v1269, 4
      %v1289 = vsel %vm570, %v1281, %v1288
      %v1290 = vrot.slane %v1285, 4
      %v1291 = vsel %vm570, %v1290, %v1273
      %v1292 = vrot.slane %v1273, 4
      %v1293 = vsel %vm570, %v1285, %v1292
      %v1294 = vpack.c.bf16 %v1233, %v1233
      %v1295 = vpack.c.bf16 %v1235, %v1235
      %v1296 = vpack.c.bf16 %v1237, %v1237
      %v1297 = vpack.c.bf16 %v1239, %v1239
      %v1298 = vpack.c.bf16 %v1287, %v1287
      %v1299 = vpack.c.bf16 %v1289, %v1289
      %v1300 = vpack.c.bf16 %v1291, %v1291
      %v1301 = vpack.c.bf16 %v1293, %v1293
      %vm1302 = vcmask 64512
      %v1304 = vsel %vm1302, %v790, 0
      %v1307 = vsel %vm1302, %v1042, 0
      %1309 = vmatpush.bf16.xpose.msra.mxu0 0
      %1310 = vmatpush.bf16.xpose.msra.mxu0 0
      %1311 = vmatpush.bf16.xpose.msra.mxu0 0
      %1312 = vmatpush.bf16.xpose.msra.mxu0 0
      %1313 = vmatpush.bf16.xpose.msra.mxu0 0
      %1314 = vmatpush.bf16.xpose.msra.mxu0 0
      %1315 = vmatpush.bf16.xpose.msra.mxu0 0
      %1316 = vmatpush.bf16.xpose.msra.mxu0 %v1307
      %1317 = vmatmul.bf16.gmra.mxu0 %v1304
      %v1318 = vpop.f32.mrf.mxu0
      %v1319 = vadd.f32 0.0, %v1318
      %v1320 = vpop.f32.mrf.mxu0
      %1321 = vdwg.mxu0
      %v1323 = vsel %vm1302, %v791, 0
      %v1326 = vsel %vm1302, %v1043, 0
      %1328 = vmatpush.bf16.xpose.msra.mxu0 0
      %1329 = vmatpush.bf16.xpose.msra.mxu0 0
      %1330 = vmatpush.bf16.xpose.msra.mxu0 0
      %1331 = vmatpush.bf16.xpose.msra.mxu0 0
      %1332 = vmatpush.bf16.xpose.msra.mxu0 0
      %1333 = vmatpush.bf16.xpose.msra.mxu0 0
      %1334 = vmatpush.bf16.xpose.msra.mxu0 0
      %1335 = vmatpush.bf16.xpose.msra.mxu0 %v1326
      %1336 = vmatmul.bf16.gmra.mxu0 %v1323
      %v1337 = vpop.f32.mrf.mxu0
      %v1338 = vadd.f32 0.0, %v1337
      %v1339 = vpop.f32.mrf.mxu0
      %1340 = vdwg.mxu0
      %v1342 = vsel %vm1302, %v792, 0
      %v1345 = vsel %vm1302, %v1044, 0
      %1347 = vmatpush.bf16.xpose.msra.mxu0 0
      %1348 = vmatpush.bf16.xpose.msra.mxu0 0
      %1349 = vmatpush.bf16.xpose.msra.mxu0 0
      %1350 = vmatpush.bf16.xpose.msra.mxu0 0
      %1351 = vmatpush.bf16.xpose.msra.mxu0 0
      %1352 = vmatpush.bf16.xpose.msra.mxu0 0
      %1353 = vmatpush.bf16.xpose.msra.mxu0 0
      %1354 = vmatpush.bf16.xpose.msra.mxu0 %v1345
      %1355 = vmatmul.bf16.gmra.mxu0 %v1342
      %v1356 = vpop.f32.mrf.mxu0
      %v1357 = vadd.f32 0.0, %v1356
      %v1358 = vpop.f32.mrf.mxu0
      %1359 = vdwg.mxu0
      %v1361 = vsel %vm1302, %v793, 0
      %v1364 = vsel %vm1302, %v1045, 0
      %1366 = vmatpush.bf16.xpose.msra.mxu0 0
      %1367 = vmatpush.bf16.xpose.msra.mxu0 0
      %1368 = vmatpush.bf16.xpose.msra.mxu0 0
      %1369 = vmatpush.bf16.xpose.msra.mxu0 0
      %1370 = vmatpush.bf16.xpose.msra.mxu0 0
      %1371 = vmatpush.bf16.xpose.msra.mxu0 0
      %1372 = vmatpush.bf16.xpose.msra.mxu0 0
      %1373 = vmatpush.bf16.xpose.msra.mxu0 %v1364
      %1374 = vmatmul.bf16.gmra.mxu0 %v1361
      %v1375 = vpop.f32.mrf.mxu0
      %v1376 = vadd.f32 0.0, %v1375
      %v1377 = vpop.f32.mrf.mxu0
      %1378 = vdwg.mxu0
      %v1380 = vsel %vm1302, %v794, 0
      %v1383 = vsel %vm1302, %v1046, 0
      %1385 = vmatpush.bf16.xpose.msra.mxu0 0
      %1386 = vmatpush.bf16.xpose.msra.mxu0 0
      %1387 = vmatpush.bf16.xpose.msra.mxu0 0
      %1388 = vmatpush.bf16.xpose.msra.mxu0 0
      %1389 = vmatpush.bf16.xpose.msra.mxu0 0
      %1390 = vmatpush.bf16.xpose.msra.mxu0 0
      %1391 = vmatpush.bf16.xpose.msra.mxu0 0
      %1392 = vmatpush.bf16.xpose.msra.mxu0 %v1383
      %1393 = vmatmul.bf16.gmra.mxu0 %v1380
      %v1394 = vpop.f32.mrf.mxu0
      %v1395 = vadd.f32 0.0, %v1394
      %v1396 = vpop.f32.mrf.mxu0
      %1397 = vdwg.mxu0
      %v1399 = vsel %vm1302, %v795, 0
      %v1402 = vsel %vm1302, %v1047, 0
      %1404 = vmatpush.bf16.xpose.msra.mxu0 0
      %1405 = vmatpush.bf16.xpose.msra.mxu0 0
      %1406 = vmatpush.bf16.xpose.msra.mxu0 0
      %1407 = vmatpush.bf16.xpose.msra.mxu0 0
      %1408 = vmatpush.bf16.xpose.msra.mxu0 0
      %1409 = vmatpush.bf16.xpose.msra.mxu0 0
      %1410 = vmatpush.bf16.xpose.msra.mxu0 0
      %1411 = vmatpush.bf16.xpose.msra.mxu0 %v1402
      %1412 = vmatmul.bf16.gmra.mxu0 %v1399
      %v1413 = vpop.f32.mrf.mxu0
      %v1414 = vadd.f32 0.0, %v1413
      %v1415 = vpop.f32.mrf.mxu0
      %1416 = vdwg.mxu0
      %v1418 = vsel %vm1302, %v796, 0
      %v1421 = vsel %vm1302, %v1048, 0
      %1423 = vmatpush.bf16.xpose.msra.mxu0 0
      %1424 = vmatpush.bf16.xpose.msra.mxu0 0
      %1425 = vmatpush.bf16.xpose.msra.mxu0 0
      %1426 = vmatpush.bf16.xpose.msra.mxu0 0
      %1427 = vmatpush.bf16.xpose.msra.mxu0 0
      %1428 = vmatpush.bf16.xpose.msra.mxu0 0
      %1429 = vmatpush.bf16.xpose.msra.mxu0 0
      %1430 = vmatpush.bf16.xpose.msra.mxu0 %v1421
      %1431 = vmatmul.bf16.gmra.mxu0 %v1418
      %v1432 = vpop.f32.mrf.mxu0
      %v1433 = vadd.f32 0.0, %v1432
      %v1434 = vpop.f32.mrf.mxu0
      %1435 = vdwg.mxu0
      %v1437 = vsel %vm1302, %v797, 0
      %v1440 = vsel %vm1302, %v1049, 0
      %1442 = vmatpush.bf16.xpose.msra.mxu0 0
      %1443 = vmatpush.bf16.xpose.msra.mxu0 0
      %1444 = vmatpush.bf16.xpose.msra.mxu0 0
      %1445 = vmatpush.bf16.xpose.msra.mxu0 0
      %1446 = vmatpush.bf16.xpose.msra.mxu0 0
      %1447 = vmatpush.bf16.xpose.msra.mxu0 0
      %1448 = vmatpush.bf16.xpose.msra.mxu0 0
      %1449 = vmatpush.bf16.xpose.msra.mxu0 %v1440
      %1450 = vmatmul.bf16.gmra.mxu0 %v1437
      %v1451 = vpop.f32.mrf.mxu0
      %v1452 = vadd.f32 0.0, %v1451
      %v1453 = vpop.f32.mrf.mxu0
      %1454 = vdwg.mxu0
      %v1455 = vlaneseq
      %v1456 = vand.u32 %v1455, 127
      %vm1457 = vcmp.lt.s32.totalorder %v1456, 5
      %v1458 = vsel %vm1457, %v1319, -1e+30
      %v1459 = vsel %vm1457, %v1338, -1e+30
      %v1460 = vsel %vm1457, %v1357, -1e+30
      %v1461 = vsel %vm1457, %v1376, -1e+30
      %v1462 = vsel %vm1457, %v1395, -1e+30
      %v1463 = vsel %vm1457, %v1414, -1e+30
      %v1464 = vsel %vm1457, %v1433, -1e+30
      %v1465 = vsel %vm1457, %v1452, -1e+30
      %v1466 = vsel %vm1302, %v1458, -inf
      %1467 = vmax.xlane.f32.xlu0 %v1466
      %v1468 = vpop.xlane.xlu0 %1467
      %v1469 = vsel %vm1302, %v1459, -inf
      %1470 = vmax.xlane.f32.xlu0 %v1469
      %v1471 = vpop.xlane.xlu0 %1470
      %v1472 = vsel %vm1302, %v1460, -inf
      %1473 = vmax.xlane.f32.xlu0 %v1472
      %v1474 = vpop.xlane.xlu0 %1473
      %v1475 = vsel %vm1302, %v1461, -inf
      %1476 = vmax.xlane.f32.xlu0 %v1475
      %v1477 = vpop.xlane.xlu0 %1476
      %v1478 = vsel %vm1302, %v1462, -inf
      %1479 = vmax.xlane.f32.xlu0 %v1478
      %v1480 = vpop.xlane.xlu0 %1479
      %v1481 = vsel %vm1302, %v1463, -inf
      %1482 = vmax.xlane.f32.xlu0 %v1481
      %v1483 = vpop.xlane.xlu0 %1482
      %v1484 = vsel %vm1302, %v1464, -inf
      %1485 = vmax.xlane.f32.xlu0 %v1484
      %v1486 = vpop.xlane.xlu0 %1485
      %v1487 = vsel %vm1302, %v1465, -inf
      %1488 = vmax.xlane.f32.xlu0 %v1487
      %v1489 = vpop.xlane.xlu0 %1488
      %v1490 = vsub.f32 %v1458, %v1468
      %v1491 = vsub.f32 %v1459, %v1471
      %v1492 = vsub.f32 %v1460, %v1474
      %v1493 = vsub.f32 %v1461, %v1477
      %v1494 = vsub.f32 %v1462, %v1480
      %v1495 = vsub.f32 %v1463, %v1483
      %v1496 = vsub.f32 %v1464, %v1486
      %v1497 = vsub.f32 %v1465, %v1489
      %v1498 = vmul.f32 %v1490, 1.442695
      %v1499 = vpow.pop %v1498
      %v1500 = vmul.f32 %v1491, 1.442695
      %v1501 = vpow.pop %v1500
      %v1502 = vmul.f32 %v1492, 1.442695
      %v1503 = vpow.pop %v1502
      %v1504 = vmul.f32 %v1493, 1.442695
      %v1505 = vpow.pop %v1504
      %v1506 = vmul.f32 %v1494, 1.442695
      %v1507 = vpow.pop %v1506
      %v1508 = vmul.f32 %v1495, 1.442695
      %v1509 = vpow.pop %v1508
      %v1510 = vmul.f32 %v1496, 1.442695
      %v1511 = vpow.pop %v1510
      %v1512 = vmul.f32 %v1497, 1.442695
      %v1513 = vpow.pop %v1512
      %v1514 = vsel %vm1302, %v1499, 0.0
      %1515 = vadd.xlane.f32.xlu0 %v1514
      %v1516 = vpop.xlane.xlu0 %1515
      %v1517 = vsel %vm1302, %v1501, 0.0
      %1518 = vadd.xlane.f32.xlu0 %v1517
      %v1519 = vpop.xlane.xlu0 %1518
      %v1520 = vsel %vm1302, %v1503, 0.0
      %1521 = vadd.xlane.f32.xlu0 %v1520
      %v1522 = vpop.xlane.xlu0 %1521
      %v1523 = vsel %vm1302, %v1505, 0.0
      %1524 = vadd.xlane.f32.xlu0 %v1523
      %v1525 = vpop.xlane.xlu0 %1524
      %v1526 = vsel %vm1302, %v1507, 0.0
      %1527 = vadd.xlane.f32.xlu0 %v1526
      %v1528 = vpop.xlane.xlu0 %1527
      %v1529 = vsel %vm1302, %v1509, 0.0
      %1530 = vadd.xlane.f32.xlu0 %v1529
      %v1531 = vpop.xlane.xlu0 %1530
      %v1532 = vsel %vm1302, %v1511, 0.0
      %1533 = vadd.xlane.f32.xlu0 %v1532
      %v1534 = vpop.xlane.xlu0 %1533
      %v1535 = vsel %vm1302, %v1513, 0.0
      %1536 = vadd.xlane.f32.xlu0 %v1535
      %v1537 = vpop.xlane.xlu0 %1536
      %v1538 = vrcp.pop %v1516
      %v1539 = vrcp.pop %v1519
      %v1540 = vrcp.pop %v1522
      %v1541 = vrcp.pop %v1525
      %v1542 = vrcp.pop %v1528
      %v1543 = vrcp.pop %v1531
      %v1544 = vrcp.pop %v1534
      %v1545 = vrcp.pop %v1537
      %v1546 = vmul.f32 %v1499, %v1538
      %v1547 = vmul.f32 %v1501, %v1539
      %v1548 = vmul.f32 %v1503, %v1540
      %v1549 = vmul.f32 %v1505, %v1541
      %v1550 = vmul.f32 %v1507, %v1542
      %v1551 = vmul.f32 %v1509, %v1543
      %v1552 = vmul.f32 %v1511, %v1544
      %v1553 = vmul.f32 %v1513, %v1545
      %v1554 = vpack.c.bf16 %v1546, %v1546
      %v1555 = vpack.c.bf16 %v1547, %v1547
      %v1556 = vpack.c.bf16 %v1548, %v1548
      %v1557 = vpack.c.bf16 %v1549, %v1549
      %v1558 = vpack.c.bf16 %v1550, %v1550
      %v1559 = vpack.c.bf16 %v1551, %v1551
      %v1560 = vpack.c.bf16 %v1552, %v1552
      %v1561 = vpack.c.bf16 %v1553, %v1553
      %v1563 = vsel %vm1302, %v1554, 0
      %vm1565 = vcmask 1043456
      %v1567 = vsel %vm1565, %v1294, 0
      %1569 = vmatpush.bf16.msra.mxu0 0
      %1570 = vmatpush.bf16.msra.mxu0 0
      %1571 = vmatpush.bf16.msra.mxu0 0
      %1572 = vmatpush.bf16.msra.mxu0 0
      %1573 = vmatpush.bf16.msra.mxu0 0
      %1574 = vmatpush.bf16.msra.mxu0 0
      %1575 = vmatpush.bf16.msra.mxu0 0
      %1576 = vmatpush.bf16.msra.mxu0 %v1567
      %1577 = vmatmul.bf16.gmra.mxu0 %v1563
      %v1578 = vpop.f32.mrf.mxu0
      %v1579 = vadd.f32 0.0, %v1578
      %v1580 = vpop.f32.mrf.mxu0
      %1581 = vdwg.mxu0
      %v1583 = vsel %vm1302, %v1555, 0
      %v1586 = vsel %vm1565, %v1295, 0
      %1588 = vmatpush.bf16.msra.mxu0 0
      %1589 = vmatpush.bf16.msra.mxu0 0
      %1590 = vmatpush.bf16.msra.mxu0 0
      %1591 = vmatpush.bf16.msra.mxu0 0
      %1592 = vmatpush.bf16.msra.mxu0 0
      %1593 = vmatpush.bf16.msra.mxu0 0
      %1594 = vmatpush.bf16.msra.mxu0 0
      %1595 = vmatpush.bf16.msra.mxu0 %v1586
      %1596 = vmatmul.bf16.gmra.mxu0 %v1583
      %v1597 = vpop.f32.mrf.mxu0
      %v1598 = vadd.f32 0.0, %v1597
      %v1599 = vpop.f32.mrf.mxu0
      %1600 = vdwg.mxu0
      %v1602 = vsel %vm1302, %v1556, 0
      %v1605 = vsel %vm1565, %v1296, 0
      %1607 = vmatpush.bf16.msra.mxu0 0
      %1608 = vmatpush.bf16.msra.mxu0 0
      %1609 = vmatpush.bf16.msra.mxu0 0
      %1610 = vmatpush.bf16.msra.mxu0 0
      %1611 = vmatpush.bf16.msra.mxu0 0
      %1612 = vmatpush.bf16.msra.mxu0 0
      %1613 = vmatpush.bf16.msra.mxu0 0
      %1614 = vmatpush.bf16.msra.mxu0 %v1605
      %1615 = vmatmul.bf16.gmra.mxu0 %v1602
      %v1616 = vpop.f32.mrf.mxu0
      %v1617 = vadd.f32 0.0, %v1616
      %v1618 = vpop.f32.mrf.mxu0
      %1619 = vdwg.mxu0
      %v1621 = vsel %vm1302, %v1557, 0
      %v1624 = vsel %vm1565, %v1297, 0
      %1626 = vmatpush.bf16.msra.mxu0 0
      %1627 = vmatpush.bf16.msra.mxu0 0
      %1628 = vmatpush.bf16.msra.mxu0 0
      %1629 = vmatpush.bf16.msra.mxu0 0
      %1630 = vmatpush.bf16.msra.mxu0 0
      %1631 = vmatpush.bf16.msra.mxu0 0
      %1632 = vmatpush.bf16.msra.mxu0 0
      %1633 = vmatpush.bf16.msra.mxu0 %v1624
      %1634 = vmatmul.bf16.gmra.mxu0 %v1621
      %v1635 = vpop.f32.mrf.mxu0
      %v1636 = vadd.f32 0.0, %v1635
      %v1637 = vpop.f32.mrf.mxu0
      %1638 = vdwg.mxu0
      %v1640 = vsel %vm1302, %v1558, 0
      %v1643 = vsel %vm1565, %v1298, 0
      %1645 = vmatpush.bf16.msra.mxu0 0
      %1646 = vmatpush.bf16.msra.mxu0 0
      %1647 = vmatpush.bf16.msra.mxu0 0
      %1648 = vmatpush.bf16.msra.mxu0 0
      %1649 = vmatpush.bf16.msra.mxu0 0
      %1650 = vmatpush.bf16.msra.mxu0 0
      %1651 = vmatpush.bf16.msra.mxu0 0
      %1652 = vmatpush.bf16.msra.mxu0 %v1643
      %1653 = vmatmul.bf16.gmra.mxu0 %v1640
      %v1654 = vpop.f32.mrf.mxu0
      %v1655 = vadd.f32 0.0, %v1654
      %v1656 = vpop.f32.mrf.mxu0
      %1657 = vdwg.mxu0
      %v1659 = vsel %vm1302, %v1559, 0
      %v1662 = vsel %vm1565, %v1299, 0
      %1664 = vmatpush.bf16.msra.mxu0 0
      %1665 = vmatpush.bf16.msra.mxu0 0
      %1666 = vmatpush.bf16.msra.mxu0 0
      %1667 = vmatpush.bf16.msra.mxu0 0
      %1668 = vmatpush.bf16.msra.mxu0 0
      %1669 = vmatpush.bf16.msra.mxu0 0
      %1670 = vmatpush.bf16.msra.mxu0 0
      %1671 = vmatpush.bf16.msra.mxu0 %v1662
      %1672 = vmatmul.bf16.gmra.mxu0 %v1659
      %v1673 = vpop.f32.mrf.mxu0
      %v1674 = vadd.f32 0.0, %v1673
      %v1675 = vpop.f32.mrf.mxu0
      %1676 = vdwg.mxu0
      %v1678 = vsel %vm1302, %v1560, 0
      %v1681 = vsel %vm1565, %v1300, 0
      %1683 = vmatpush.bf16.msra.mxu0 0
      %1684 = vmatpush.bf16.msra.mxu0 0
      %1685 = vmatpush.bf16.msra.mxu0 0
      %1686 = vmatpush.bf16.msra.mxu0 0
      %1687 = vmatpush.bf16.msra.mxu0 0
      %1688 = vmatpush.bf16.msra.mxu0 0
      %1689 = vmatpush.bf16.msra.mxu0 0
      %1690 = vmatpush.bf16.msra.mxu0 %v1681
      %1691 = vmatmul.bf16.gmra.mxu0 %v1678
      %v1692 = vpop.f32.mrf.mxu0
      %v1693 = vadd.f32 0.0, %v1692
      %v1694 = vpop.f32.mrf.mxu0
      %1695 = vdwg.mxu0
      %v1697 = vsel %vm1302, %v1561, 0
      %v1700 = vsel %vm1565, %v1301, 0
      %1702 = vmatpush.bf16.msra.mxu0 0
      %1703 = vmatpush.bf16.msra.mxu0 0
      %1704 = vmatpush.bf16.msra.mxu0 0
      %1705 = vmatpush.bf16.msra.mxu0 0
      %1706 = vmatpush.bf16.msra.mxu0 0
      %1707 = vmatpush.bf16.msra.mxu0 0
      %1708 = vmatpush.bf16.msra.mxu0 0
      %1709 = vmatpush.bf16.msra.mxu0 %v1700
      %1710 = vmatmul.bf16.gmra.mxu0 %v1697
      %v1711 = vpop.f32.mrf.mxu0
      %v1712 = vadd.f32 0.0, %v1711
      %v1713 = vpop.f32.mrf.mxu0
      %1714 = vdwg.mxu0
      %v1715 = vrot.slane %v1617, 4
      %v1716 = vsel %vm570, %v1715, %v1579
      %v1717 = vrot.slane %v1579, 4
      %v1718 = vsel %vm570, %v1617, %v1717
      %v1720 = vunpack.c.l.s4 1983009808
      %v1721 = vunpack.c.0.s8 %v1720
      %v1722 = vperm.slane %v1716, %v1721
      %v1724 = vunpack.c.l.s4 1983009808
      %v1725 = vunpack.c.0.s8 %v1724
      %v1726 = vperm.slane %v1718, %v1725
      %v1727 = vrot.slane %v1636, 4
      %v1728 = vsel %vm570, %v1727, %v1598
      %v1729 = vrot.slane %v1598, 4
      %v1730 = vsel %vm570, %v1636, %v1729
      %v1732 = vunpack.c.l.s4 1983009808
      %v1733 = vunpack.c.0.s8 %v1732
      %v1734 = vperm.slane %v1728, %v1733
      %v1736 = vunpack.c.l.s4 1983009808
      %v1737 = vunpack.c.0.s8 %v1736
      %v1738 = vperm.slane %v1730, %v1737
      %v1739 = vrot.slane %v1734, 4
      %v1740 = vsel %vm570, %v1739, %v1722
      %v1741 = vrot.slane %v1722, 4
      %v1742 = vsel %vm570, %v1734, %v1741
      %v1744 = vunpack.c.l.s4 1934713408
      %v1745 = vunpack.c.0.s8 %v1744
      %v1746 = vperm.slane %v1740, %v1745
      %v1748 = vunpack.c.l.s4 1934713408
      %v1749 = vunpack.c.0.s8 %v1748
      %v1750 = vperm.slane %v1742, %v1749
      %v1751 = vrot.slane %v1738, 4
      %v1752 = vsel %vm570, %v1751, %v1726
      %v1753 = vrot.slane %v1726, 4
      %v1754 = vsel %vm570, %v1738, %v1753
      %v1756 = vunpack.c.l.s4 1934713408
      %v1757 = vunpack.c.0.s8 %v1756
      %v1758 = vperm.slane %v1752, %v1757
      %v1760 = vunpack.c.l.s4 1934713408
      %v1761 = vunpack.c.0.s8 %v1760
      %v1762 = vperm.slane %v1754, %v1761
      %v1763 = vrot.slane %v1746, 4
      %v1764 = vsel %vm570, 0.0, %v1763
      %v1765 = vrot.slane %v1750, 4
      %v1766 = vsel %vm570, 0.0, %v1765
      %v1767 = vrot.slane %v1758, 4
      %v1768 = vsel %vm570, 0.0, %v1767
      %v1769 = vrot.slane %v1762, 4
      %v1770 = vsel %vm570, 0.0, %v1769
      %v1771 = vrot.slane %v1693, 4
      %v1772 = vsel %vm570, %v1771, %v1655
      %v1773 = vrot.slane %v1655, 4
      %v1774 = vsel %vm570, %v1693, %v1773
      %v1776 = vunpack.c.l.s4 1983009808
      %v1777 = vunpack.c.0.s8 %v1776
      %v1778 = vperm.slane %v1772, %v1777
      %v1780 = vunpack.c.l.s4 1983009808
      %v1781 = vunpack.c.0.s8 %v1780
      %v1782 = vperm.slane %v1774, %v1781
      %v1783 = vrot.slane %v1712, 4
      %v1784 = vsel %vm570, %v1783, %v1674
      %v1785 = vrot.slane %v1674, 4
      %v1786 = vsel %vm570, %v1712, %v1785
      %v1788 = vunpack.c.l.s4 1983009808
      %v1789 = vunpack.c.0.s8 %v1788
      %v1790 = vperm.slane %v1784, %v1789
      %v1792 = vunpack.c.l.s4 1983009808
      %v1793 = vunpack.c.0.s8 %v1792
      %v1794 = vperm.slane %v1786, %v1793
      %v1795 = vrot.slane %v1790, 4
      %v1796 = vsel %vm570, %v1795, %v1778
      %v1797 = vrot.slane %v1778, 4
      %v1798 = vsel %vm570, %v1790, %v1797
      %v1800 = vunpack.c.l.s4 1934713408
      %v1801 = vunpack.c.0.s8 %v1800
      %v1802 = vperm.slane %v1796, %v1801
      %v1804 = vunpack.c.l.s4 1934713408
      %v1805 = vunpack.c.0.s8 %v1804
      %v1806 = vperm.slane %v1798, %v1805
      %v1807 = vrot.slane %v1794, 4
      %v1808 = vsel %vm570, %v1807, %v1782
      %v1809 = vrot.slane %v1782, 4
      %v1810 = vsel %vm570, %v1794, %v1809
      %v1812 = vunpack.c.l.s4 1934713408
      %v1813 = vunpack.c.0.s8 %v1812
      %v1814 = vperm.slane %v1808, %v1813
      %v1816 = vunpack.c.l.s4 1934713408
      %v1817 = vunpack.c.0.s8 %v1816
      %v1818 = vperm.slane %v1810, %v1817
      %v1819 = vrot.slane %v1802, 4
      %v1820 = vsel %vm570, 0.0, %v1819
      %v1821 = vrot.slane %v1806, 4
      %v1822 = vsel %vm570, 0.0, %v1821
      %v1823 = vrot.slane %v1814, 4
      %v1824 = vsel %vm570, 0.0, %v1823
      %v1825 = vrot.slane %v1818, 4
      %v1826 = vsel %vm570, 0.0, %v1825
      %v1827 = vsel %vm570, %v1765, %v1746
      %v1829 = vunpack.c.l.s4 1983009808
      %v1830 = vunpack.c.0.s8 %v1829
      %v1831 = vperm.slane %v1827, %v1830
      %v1832 = vrot.slane %v1766, 4
      %v1833 = vsel %vm570, %v1832, %v1764
      %v1835 = vunpack.c.l.s4 1983009808
      %v1836 = vunpack.c.0.s8 %v1835
      %v1837 = vperm.slane %v1833, %v1836
      %v1838 = vsel %vm570, %v1769, %v1758
      %v1840 = vunpack.c.l.s4 1983009808
      %v1841 = vunpack.c.0.s8 %v1840
      %v1842 = vperm.slane %v1838, %v1841
      %v1843 = vrot.slane %v1770, 4
      %v1844 = vsel %vm570, %v1843, %v1768
      %v1846 = vunpack.c.l.s4 1983009808
      %v1847 = vunpack.c.0.s8 %v1846
      %v1848 = vperm.slane %v1844, %v1847
      %v1849 = vrot.slane %v1837, 4
      %v1850 = vsel %vm570, %v1849, %v1831
      %v1851 = vrot.slane %v1831, 4
      %v1852 = vsel %vm570, %v1837, %v1851
      %v1854 = vunpack.c.l.s4 1934713408
      %v1855 = vunpack.c.0.s8 %v1854
      %v1856 = vperm.slane %v1850, %v1855
      %v1858 = vunpack.c.l.s4 1934713408
      %v1859 = vunpack.c.0.s8 %v1858
      %v1860 = vperm.slane %v1852, %v1859
      %v1861 = vrot.slane %v1848, 4
      %v1862 = vsel %vm570, %v1861, %v1842
      %v1863 = vrot.slane %v1842, 4
      %v1864 = vsel %vm570, %v1848, %v1863
      %v1866 = vunpack.c.l.s4 1934713408
      %v1867 = vunpack.c.0.s8 %v1866
      %v1868 = vperm.slane %v1862, %v1867
      %v1870 = vunpack.c.l.s4 1934713408
      %v1871 = vunpack.c.0.s8 %v1870
      %v1872 = vperm.slane %v1864, %v1871
      %v1873 = vrot.slane %v1868, 4
      %v1874 = vsel %vm570, %v1873, %v1856
      %v1875 = vrot.slane %v1856, 4
      %v1876 = vsel %vm570, %v1868, %v1875
      %v1877 = vrot.slane %v1872, 4
      %v1878 = vsel %vm570, %v1877, %v1860
      %v1879 = vrot.slane %v1860, 4
      %v1880 = vsel %vm570, %v1872, %v1879
      %v1881 = vsel %vm570, %v1821, %v1802
      %v1883 = vunpack.c.l.s4 1983009808
      %v1884 = vunpack.c.0.s8 %v1883
      %v1885 = vperm.slane %v1881, %v1884
      %v1886 = vrot.slane %v1822, 4
      %v1887 = vsel %vm570, %v1886, %v1820
      %v1889 = vunpack.c.l.s4 1983009808
      %v1890 = vunpack.c.0.s8 %v1889
      %v1891 = vperm.slane %v1887, %v1890
      %v1892 = vsel %vm570, %v1825, %v1814
      %v1894 = vunpack.c.l.s4 1983009808
      %v1895 = vunpack.c.0.s8 %v1894
      %v1896 = vperm.slane %v1892, %v1895
      %v1897 = vrot.slane %v1826, 4
      %v1898 = vsel %vm570, %v1897, %v1824
      %v1900 = vunpack.c.l.s4 1983009808
      %v1901 = vunpack.c.0.s8 %v1900
      %v1902 = vperm.slane %v1898, %v1901
      %v1903 = vrot.slane %v1891, 4
      %v1904 = vsel %vm570, %v1903, %v1885
      %v1905 = vrot.slane %v1885, 4
      %v1906 = vsel %vm570, %v1891, %v1905
      %v1908 = vunpack.c.l.s4 1934713408
      %v1909 = vunpack.c.0.s8 %v1908
      %v1910 = vperm.slane %v1904, %v1909
      %v1912 = vunpack.c.l.s4 1934713408
      %v1913 = vunpack.c.0.s8 %v1912
      %v1914 = vperm.slane %v1906, %v1913
      %v1915 = vrot.slane %v1902, 4
      %v1916 = vsel %vm570, %v1915, %v1896
      %v1917 = vrot.slane %v1896, 4
      %v1918 = vsel %vm570, %v1902, %v1917
      %v1920 = vunpack.c.l.s4 1934713408
      %v1921 = vunpack.c.0.s8 %v1920
      %v1922 = vperm.slane %v1916, %v1921
      %v1924 = vunpack.c.l.s4 1934713408
      %v1925 = vunpack.c.0.s8 %v1924
      %v1926 = vperm.slane %v1918, %v1925
      %v1927 = vrot.slane %v1922, 4
      %v1928 = vsel %vm570, %v1927, %v1910
      %v1929 = vrot.slane %v1910, 4
      %v1930 = vsel %vm570, %v1922, %v1929
      %v1931 = vrot.slane %v1926, 4
      %v1932 = vsel %vm570, %v1931, %v1914
      %v1933 = vrot.slane %v1914, 4
      %v1934 = vsel %vm570, %v1926, %v1933
      %1937 = vrot.lane.b32.xlu0 %v1876, 8
      %v1938 = vpop.permute.xlu0 %1937
      %1939 = vrot.lane.b32.xlu0 %v1930, 8
      %v1940 = vpop.permute.xlu0 %1939
      %1945 = vrot.lane.b32.xlu0 %v1878, 16
      %v1946 = vpop.permute.xlu0 %1945
      %1947 = vrot.lane.b32.xlu0 %v1932, 16
      %v1948 = vpop.permute.xlu0 %1947
      %1953 = vrot.lane.b32.xlu0 %v1880, 24
      %v1954 = vpop.permute.xlu0 %1953
      %1955 = vrot.lane.b32.xlu0 %v1934, 24
      %v1956 = vpop.permute.xlu0 %1955
      %v1959 = vsel %vm1302, %v1874, %v1938
      %v1960 = vsel %vm1302, %v1928, %v1940
      %vm1961 = vcmask 130048
      %v1962 = vsel %vm1961, %v1959, %v1946
      %v1963 = vsel %vm1961, %v1960, %v1948
      %vm1964 = vcmask 195584
      %v1965 = vsel %vm1964, %v1962, %v1954
      %v1966 = vsel %vm1964, %v1963, %v1956
      %v1967 = vpack.c.bf16 %v1966, %v1965
      %v1968 = vld [vmem:[%s5] sm:$0xf]
      %v1969 = vld [vmem:[%s5 + $0x4] sm:$0xf]
      %v1970 = vld [vmem:[%s5 + $0x8] sm:$0xf]
      %v1971 = vld [vmem:[%s5 + $0xc] sm:$0xf]
      %v1972 = vld [vmem:[%s6] sm:$0x1]
      %v1974 = vperm.slane %v1972, 0
      %v1980 = vunpack.c.l.b16 %v1968
      %v1981 = vunpack.c.l.b16 %v1969
      %v1982 = vunpack.c.l.b16 %v1970
      %v1983 = vunpack.c.l.b16 %v1971
      %v1984 = vpack.c.b16 %v1981, %v1980
      %v1985 = vpack.c.b16 %v1983, %v1982
      %v1989 = vsel %vm449, %v1967, 0
      %1991 = vmatpush.bf16.msra.mxu0 0
      %1992 = vmatpush.bf16.msra.mxu0 0
      %1993 = vmatpush.bf16.msra.mxu0 0
      %1994 = vmatpush.bf16.msra.mxu0 0
      %1995 = vmatpush.bf16.msra.mxu0 0
      %1996 = vmatpush.bf16.msra.mxu0 0
      %1997 = vmatpush.bf16.msra.mxu0 %v1985
      %1998 = vmatpush.bf16.msra.mxu0 %v1984
      %1999 = vmatmul.bf16.gmra.mxu0 %v1989
      %v2000 = vpop.f32.mrf.mxu0
      %v2001 = vadd.f32 %v1974, %v2000
      %v2002 = vpop.f32.mrf.mxu0
      %v2003 = vadd.f32 %v1974, %v2002
      %2004 = vdwg.mxu0
      %v2005 = vadd.f32 %v445, %v2001
      %v2006 = vadd.f32 %v446, %v2003
      %v2007 = vld [vmem:[%s7] sm:$0x1]
      %v2008 = vld [vmem:[%s8] sm:$0x1]
      %v2009 = vsel %vm449, %v2005, 0.0
      %2010 = vadd.xlane.f32.xlu0 %v2009
      %v2011 = vpop.xlane.xlu0 %2010
      %v2012 = vsel %vm449, %v2006, 0.0
      %2013 = vadd.xlane.f32.xlu0 %v2012
      %v2014 = vpop.xlane.xlu0 %2013
      %v2015 = vmul.f32 %v2011, %v462
      %v2016 = vmul.f32 %v2014, %v462
      %v2017 = vsub.f32 %v2005, %v2015
      %v2018 = vsub.f32 %v2006, %v2016
      %v2019 = vmul.f32 %v2017, %v2017
      %v2020 = vmul.f32 %v2018, %v2018
      %v2021 = vsel %vm449, %v2019, 0.0
      %2022 = vadd.xlane.f32.xlu0 %v2021
      %v2023 = vpop.xlane.xlu0 %2022
      %v2024 = vsel %vm449, %v2020, 0.0
      %2025 = vadd.xlane.f32.xlu0 %v2024
      %v2026 = vpop.xlane.xlu0 %2025
      %v2027 = vmul.f32 %v2023, %v462
      %v2028 = vmul.f32 %v2026, %v462
      %v2029 = vadd.f32 %v2027, 1e-05
      %v2030 = vadd.f32 %v2028, 1e-05
      %v2031 = vrsqrt.pop %v2029
      %v2032 = vmul.f32 %v2031, %v2029
      %v2033 = vmul.f32 %v2032, %v2031
      %v2034 = vmul.f32 0.5, %v2033
      %v2035 = vsub.f32 1.5, %v2034
      %v2036 = vmul.f32 %v2031, %v2035
      %vm2037 = vweird.f32 %v2029
      %vm2038 = vweird.f32 %v2031
      %vm2039 = vmor %vm2037, %vm2038
      %v2040 = vsel %vm2039, %v2031, %v2036
      %v2041 = vrsqrt.pop %v2030
      %v2042 = vmul.f32 %v2041, %v2030
      %v2043 = vmul.f32 %v2042, %v2041
      %v2044 = vmul.f32 0.5, %v2043
      %v2045 = vsub.f32 1.5, %v2044
      %v2046 = vmul.f32 %v2041, %v2045
      %vm2047 = vweird.f32 %v2030
      %vm2048 = vweird.f32 %v2041
      %vm2049 = vmor %vm2047, %vm2048
      %v2050 = vsel %vm2049, %v2041, %v2046
      %v2051 = vmul.f32 %v2017, %v2040
      %v2052 = vmul.f32 %v2018, %v2050
      %v2054 = vperm.slane %v2007, 0
      %v2056 = vmul.f32 %v2051, %v2054
      %v2057 = vmul.f32 %v2052, %v2054
      %v2059 = vperm.slane %v2008, 0
      %v2061 = vadd.f32 %v2056, %v2059
      %v2062 = vadd.f32 %v2057, %v2059
      %v2063 = vpack.c.bf16 %v2062, %v2061
      %v2064 = vld [vmem:[%s9] sm:$0xf]
      %v2065 = vld [vmem:[%s9 + $0x4] sm:$0xf]
      %v2066 = vld [vmem:[%s9 + $0x8] sm:$0xf]
      %v2067 = vld [vmem:[%s9 + $0xc] sm:$0xf]
      %v2068 = vld [vmem:[%s10] sm:$0x1]
      %v2070 = vperm.slane %v2068, 0
      %v2076 = vunpack.c.l.b16 %v2064
      %v2077 = vunpack.c.l.b16 %v2065
      %v2078 = vunpack.c.l.b16 %v2066
      %v2079 = vunpack.c.l.b16 %v2067
      %v2080 = vpack.c.b16 %v2077, %v2076
      %v2081 = vpack.c.b16 %v2079, %v2078
      %v2085 = vsel %vm449, %v2063, 0
      %2087 = vmatpush.bf16.msra.mxu0 0
      %2088 = vmatpush.bf16.msra.mxu0 0
      %2089 = vmatpush.bf16.msra.mxu0 0
      %2090 = vmatpush.bf16.msra.mxu0 0
      %2091 = vmatpush.bf16.msra.mxu0 0
      %2092 = vmatpush.bf16.msra.mxu0 0
      %2093 = vmatpush.bf16.msra.mxu0 %v2081
      %2094 = vmatpush.bf16.msra.mxu0 %v2080
      %2095 = vmatmul.bf16.gmra.mxu0 %v2085
      %v2096 = vpop.f32.mrf.mxu0
      %v2097 = vadd.f32 %v2070, %v2096
      %v2098 = vpop.f32.mrf.mxu0
      %v2099 = vadd.f32 %v2070, %v2098
      %2100 = vdwg.mxu0
      %v2101 = vmul.f32 %v2097, 1.702
      %v2102 = vmul.f32 %v2099, 1.702
      %v2103 = vxor.u32 %v2101, 2147483648
      %v2104 = vxor.u32 %v2102, 2147483648
      %v2105 = vmul.f32 %v2103, 1.442695
      %v2106 = vpow.pop %v2105
      %v2107 = vmul.f32 %v2104, 1.442695
      %v2108 = vpow.pop %v2107
      %v2109 = vadd.f32 %v2106, 1.0
      %v2110 = vadd.f32 %v2108, 1.0
      %v2111 = vrcp.pop %v2109
      %v2112 = vmul.f32 %v2109, %v2111
      %v2113 = vsub.f32 1.0, %v2112
      %v2114 = vmul.f32 %v2111, %v2113
      %v2115 = vadd.f32 %v2111, %v2114
      %vm2116 = vweird.f32 %v2109
      %vm2117 = vweird.f32 %v2111
      %vm2118 = vmor %vm2116, %vm2117
      %v2119 = vsel %vm2118, %v2111, %v2115
      %v2120 = vand.u32 2147483647, %v2109
      %vm2121 = vcmp.eq.f32.partialorder %v2120, 8.507059e+37
      %v2122 = vand.u32 %v2109, 2147483648
      %v2123 = vor.u32 1.1754944e-38, %v2122
      %v2124 = vsel %vm2121, %v2123, %v2119
      %v2125 = vmul.f32 1.0, %v2124
      %v2126 = vrcp.pop %v2110
      %v2127 = vmul.f32 %v2110, %v2126
      %v2128 = vsub.f32 1.0, %v2127
      %v2129 = vmul.f32 %v2126, %v2128
      %v2130 = vadd.f32 %v2126, %v2129
      %vm2131 = vweird.f32 %v2110
      %vm2132 = vweird.f32 %v2126
      %vm2133 = vmor %vm2131, %vm2132
      %v2134 = vsel %vm2133, %v2126, %v2130
      %v2135 = vand.u32 2147483647, %v2110
      %vm2136 = vcmp.eq.f32.partialorder %v2135, 8.507059e+37
      %v2137 = vand.u32 %v2110, 2147483648
      %v2138 = vor.u32 1.1754944e-38, %v2137
      %v2139 = vsel %vm2136, %v2138, %v2134
      %v2140 = vmul.f32 1.0, %v2139
      %v2141 = vmul.f32 %v2097, %v2125
      %v2142 = vmul.f32 %v2099, %v2140
      %v2143 = vpack.c.bf16 %v2142, %v2141
      %v2144 = vld [vmem:[%s11] sm:$0xf]
      %v2145 = vld [vmem:[%s11 + $0x4] sm:$0xf]
      %v2146 = vld [vmem:[%s11 + $0x8] sm:$0xf]
      %v2147 = vld [vmem:[%s11 + $0xc] sm:$0xf]
      %v2148 = vld [vmem:[%s11 + $0x10] sm:$0xf]
      %v2149 = vld [vmem:[%s11 + $0x14] sm:$0xf]
      %v2150 = vld [vmem:[%s11 + $0x18] sm:$0xf]
      %v2151 = vld [vmem:[%s11 + $0x1c] sm:$0xf]
      %v2152 = vld [vmem:[%s11 + $0x20] sm:$0xf]
      %v2153 = vld [vmem:[%s11 + $0x24] sm:$0xf]
      %v2154 = vld [vmem:[%s11 + $0x28] sm:$0xf]
      %v2155 = vld [vmem:[%s11 + $0x2c] sm:$0xf]
      %v2156 = vld [vmem:[%s11 + $0x30] sm:$0xf]
      %v2157 = vld [vmem:[%s11 + $0x34] sm:$0xf]
      %v2158 = vld [vmem:[%s11 + $0x38] sm:$0xf]
      %v2159 = vld [vmem:[%s11 + $0x3c] sm:$0xf]
      %v2160 = vld [vmem:[%s12] sm:$0x1]
      %v2162 = vperm.slane %v2160, 0
      %v2180 = vunpack.c.l.b16 %v2144
      %v2181 = vunpack.c.l.b16 %v2145
      %v2182 = vunpack.c.l.b16 %v2146
      %v2183 = vunpack.c.l.b16 %v2147
      %v2184 = vunpack.c.l.b16 %v2148
      %v2185 = vunpack.c.l.b16 %v2149
      %v2186 = vunpack.c.l.b16 %v2150
      %v2187 = vunpack.c.l.b16 %v2151
      %v2188 = vunpack.c.l.b16 %v2152
      %v2189 = vunpack.c.l.b16 %v2153
      %v2190 = vunpack.c.l.b16 %v2154
      %v2191 = vunpack.c.l.b16 %v2155
      %v2192 = vunpack.c.l.b16 %v2156
      %v2193 = vunpack.c.l.b16 %v2157
      %v2194 = vunpack.c.l.b16 %v2158
      %v2195 = vunpack.c.l.b16 %v2159
      %v2196 = vpack.c.b16 %v2181, %v2180
      %v2197 = vpack.c.b16 %v2183, %v2182
      %v2198 = vpack.c.b16 %v2185, %v2184
      %v2199 = vpack.c.b16 %v2187, %v2186
      %v2200 = vpack.c.b16 %v2189, %v2188
      %v2201 = vpack.c.b16 %v2191, %v2190
      %v2202 = vpack.c.b16 %v2193, %v2192
      %v2203 = vpack.c.b16 %v2195, %v2194
      %2212 = vmatpush.bf16.msra.mxu0 %v2203
      %2213 = vmatpush.bf16.msra.mxu0 %v2202
      %2214 = vmatpush.bf16.msra.mxu0 %v2201
      %2215 = vmatpush.bf16.msra.mxu0 %v2200
      %2216 = vmatpush.bf16.msra.mxu0 %v2199
      %2217 = vmatpush.bf16.msra.mxu0 %v2198
      %2218 = vmatpush.bf16.msra.mxu0 %v2197
      %2219 = vmatpush.bf16.msra.mxu0 %v2196
      %2220 = vmatmul.bf16.gmra.mxu0 %v2143
      %v2221 = vpop.f32.mrf.mxu0
      %v2222 = vadd.f32 %v2162, %v2221
      %v2223 = vpop.f32.mrf.mxu0
      %v2224 = vadd.f32 %v2162, %v2223
      %2225 = vdwg.mxu0
      %v2226 = vadd.f32 %v2005, %v2222
      %v2227 = vadd.f32 %v2006, %v2224
      %2228 = vst.msk [vmem:[%s442] sm:$0xff] %vm449, %v2226
      %2229 = vst.msk [vmem:[%s442 + $0x8] sm:$0xff] %vm449, %v2227
      %s2230 = smul.u32 2, %s24
      %p2231 = scmp.lt.s32.totalorder %s2230, 3
      %s2232 = scalar_select %p2231, %s2230, 3
      %s2233 = smul.addr %s2232, 8
      %s2234 = scalar_lea.vmem %s13, %s2233
      // Predicated region
      $region73: #{clip_forward.8} parent=71 // pred_check
        %p2235 = pneg %p320
      $region74: #{clip_forward.8} parent=71 // pred_check_branch
        %2237 = sbr.rel (%p2235) target = $region76
      $region75: #{clip_forward.8} parent=71 // pred_region
        %s2238 = smul.u32 2, %s24
      $region76: #{clip_forward.8} parent=71 // pred_fallthru
        _
    $region72: #{clip_forward.8} parent=5 // pred_fallthru
      _
    %p2239 = scmp.le.s32.totalorder 2, %s19
    // Predicated region
    $region77: #{clip_forward.8} parent=5 // pred_check
      %p2240 = pneg %p2239
    $region78: #{clip_forward.8} parent=5 // pred_check_branch
      %2242 = sbr.rel (%p2240) target = $region80
    $region79: #{clip_forward.8} parent=5 // pred_region
      %s2243 = ssub.s32 %s19, 2
      // Predicated region
      $region81: #{clip_forward.8} parent=79 // pred_check
        %p2244 = pneg %p326
      $region82: #{clip_forward.8} parent=79 // pred_check_branch
        %2246 = sbr.rel (%p2244) target = $region84
      $region83: #{clip_forward.8} parent=79 // pred_region
        %s2247 = smul.u32 2, %s25
        %p2248 = scmp.lt.s32.totalorder %s2247, 3
        %s2249 = scalar_select %p2248, %s2247, 3
        %s2250 = smul.addr %s2249, 8
        %s2251 = scalar_lea.vmem %s13, %s2250
      $region84: #{clip_forward.8} parent=79 // pred_fallthru
        _
    $region80: #{clip_forward.8} parent=5 // pred_fallthru
      _
  $region6: #{clip_forward.8} parent=0 // loop_footer
    %s23 = sadd.s32 1, %s19
  $region7: #{clip_forward.8} parent=0 // loop_footer_branch
    %18 = sbr.rel target = $region3
  $region8: #{clip_forward.8} parent=0 // loop_exit
    _

</llo_original>
